<compile_context>
chip_gen: v7x
topology: tpu7x:2x2x1
jax: 0.10.0
libtpu: 0.0.40
codegen_flags: <defaults>
</compile_context>

<pallas_src>
import functools

import jax
import jax.numpy as jnp
from jax.experimental import pallas as pl
from jax.experimental.pallas import tpu as pltpu

# ----- hyperparameters (small, consistent with the StackGRU module) ---------
VOCAB_SIZE = 32
EMBEDDING_SIZE = 16
RNN_CELL_SIZE = 32      # H
STACK_WIDTH = 8         # W
STACK_DEPTH = 8         # D
N_LAYERS = 2
BATCH_SIZE = 4
PAD_INDEX = 0
SEQ_LEN = 6


def _stack_gru_seq_kernel(n_layers, stack_width, *refs):
    f32 = jnp.float32
    (tok_ref, emb_tab_ref, hid0_ref, stk0_ref,
     wcs_ref, bcs_ref,
     wih0e_ref, wih0s_ref, whh0_ref, bih0_ref, bhh0_ref) = refs[:11]
    rest = refs[11:]
    n_extra = 4 * (n_layers - 1)
    layer_refs = rest[:n_extra]
    out_ref, hid_ref, stk_ref = rest[n_extra:]

    B = tok_ref.shape[1]
    V, _E = emb_tab_ref.shape
    H = hid_ref.shape[-1]
    DW = stk_ref.shape[-1]
    W = stack_width

    t = pl.program_id(0)

    # Initialize the VMEM-resident recurrent state from the inputs at t == 0.
    @pl.when(t == 0)
    def _init():
        hid_ref[...] = hid0_ref[...]
        stk_ref[...] = stk0_ref[...]

    # ---- embedding lookup in-kernel: one-hot matmul against VMEM table -----
    tok = tok_ref[0]                                             # [B, 1] int32
    vocab_iota = jax.lax.broadcasted_iota(jnp.int32, (B, V), 1)  # [B, V]
    onehot = (vocab_iota == tok).astype(f32)                     # [B, V]
    emb = jnp.dot(onehot, emb_tab_ref[...],
                  preferred_element_type=f32)                    # [B, E]

    h_last = hid_ref[n_layers - 1]                               # [B, H]
    prev_stack = stk_ref[...]                                    # [B, D*W]

    # ---- fused stack head: single matmul -> softmax(ctrl) + tanh(input) ----
    head = (jnp.dot(h_last, wcs_ref[...], preferred_element_type=f32)
            + bcs_ref[...])                                      # [B, 3+W]
    ctrl = head[:, :3]
    ctrl = ctrl - jnp.max(ctrl, axis=-1, keepdims=True)
    ctrl = jnp.exp(ctrl)
    ctrl = ctrl * pl.reciprocal(jnp.sum(ctrl, axis=-1, keepdims=True),
                                approx=True)                     # [B, 3]
    stack_in = jnp.tanh(head[:, 3:3 + W])                        # [B, W]

    a_push = ctrl[:, 0:1]                                        # [B, 1]
    a_pop = ctrl[:, 1:2]
    a_noop = ctrl[:, 2:3]

    # ---- lane-dense stack augmentation (push / pop / no-op) ----------------
    zeros_w = jnp.zeros((B, W), f32)
    stack_down = jnp.concatenate([prev_stack[:, W:], zeros_w], axis=-1)
    stack_up = jnp.concatenate([stack_in, prev_stack[:, :DW - W]], axis=-1)
    new_stack = a_noop * prev_stack + a_push * stack_up + a_pop * stack_down
    stk_ref[...] = new_stack
    stack_top = new_stack[:, :W]                                 # [B, W]

    # ---- multi-layer GRU cell with fused [in, 3H] gate matmuls -------------
    # PyTorch gate order r, z, n lives on lanes [0:H), [H:2H), [2H:3H).
    x = emb
    for l in range(n_layers):
        h_prev = hid_ref[l]                                      # [B, H]
        if l == 0:
            gi = (jnp.dot(emb, wih0e_ref[...], preferred_element_type=f32)
                  + jnp.dot(stack_top, wih0s_ref[...], preferred_element_type=f32)
                  + bih0_ref[...])                               # [B, 3H]
            whh_ref, bhh_ref = whh0_ref, bhh0_ref
        else:
            wih_ref, whh_ref, bih_ref, bhh_ref = layer_refs[4 * (l - 1):4 * l]
            gi = jnp.dot(x, wih_ref[...], preferred_element_type=f32) + bih_ref[...]
        gh = jnp.dot(h_prev, whh_ref[...], preferred_element_type=f32) + bhh_ref[...]
        r = jax.nn.sigmoid(gi[:, :H] + gh[:, :H])
        z = jax.nn.sigmoid(gi[:, H:2 * H] + gh[:, H:2 * H])
        n = jnp.tanh(gi[:, 2 * H:] + r * gh[:, 2 * H:])
        h_new = (1.0 - z) * n + z * h_prev
        hid_ref[l] = h_new
        # TODO(synk): inter-layer dropout (training-mode only) omitted — eval semantics.
        x = h_new

    out_ref[0] = x


def init_params(key):
    def u(k, shape, scale=0.1):
        return jax.random.uniform(k, shape, jnp.float32, -scale, scale)

    ks = iter(jax.random.split(key, 16 + 4 * N_LAYERS))
    params = {}
    emb_table = u(next(ks), (VOCAB_SIZE, EMBEDDING_SIZE))
    emb_table = emb_table.at[PAD_INDEX].set(0.0)          # padding_idx row is zero
    params['embedding'] = emb_table
    params['wc'] = u(next(ks), (RNN_CELL_SIZE, 3))        # stack_controls_layer (transposed)
    params['bc'] = u(next(ks), (1, 3))
    params['ws'] = u(next(ks), (RNN_CELL_SIZE, STACK_WIDTH))  # stack_input_layer (transposed)
    params['bs'] = u(next(ks), (1, STACK_WIDTH))
    gru_in0 = EMBEDDING_SIZE + STACK_WIDTH
    params['wih0'] = u(next(ks), (3, gru_in0, RNN_CELL_SIZE))
    params['whh0'] = u(next(ks), (3, RNN_CELL_SIZE, RNN_CELL_SIZE))
    params['bih0'] = u(next(ks), (3, 1, RNN_CELL_SIZE))
    params['bhh0'] = u(next(ks), (3, 1, RNN_CELL_SIZE))
    params['layers'] = []
    for _ in range(1, N_LAYERS):
        wih = u(next(ks), (3, RNN_CELL_SIZE, RNN_CELL_SIZE))
        whh = u(next(ks), (3, RNN_CELL_SIZE, RNN_CELL_SIZE))
        bih = u(next(ks), (3, 1, RNN_CELL_SIZE))
        bhh = u(next(ks), (3, 1, RNN_CELL_SIZE))
        params['layers'].append((wih, whh, bih, bhh))
    return params


def _relayout_gate_weight(w):   # [3, in, H] -> [in, 3H], gate order preserved on lanes
    g, i, h = w.shape
    return jnp.transpose(w, (1, 0, 2)).reshape(i, g * h)


def _relayout_gate_bias(b):     # [3, 1, H] -> [1, 3H]
    g, _, h = b.shape
    return jnp.transpose(b, (1, 0, 2)).reshape(1, g * h)


def stack_gru_sequence(params, tokens, hidden, stack):
    """tokens: [T, B] int32, hidden: [L, B, H], stack: [B, D, W].

    Runs T StackGRU steps in one pallas_call.  Returns per-step GRU outputs
    [T, B, H], final hidden [L, B, H], final stack [B, D, W].
    """
    T, B = tokens.shape
    L, _, H = hidden.shape
    _, D, W = stack.shape
    V, E = params['embedding'].shape
    B_pad = max(8, ((B + 7) // 8) * 8)

    # ---- pad batch to a multiple of 8 sublanes ------------------------------
    tok_p = jnp.full((T, B_pad), PAD_INDEX, jnp.int32).at[:, :B].set(tokens.astype(jnp.int32))
    tok_p = tok_p.reshape(T, B_pad, 1)
    hid_p = jnp.zeros((L, B_pad, H), jnp.float32).at[:, :B, :].set(hidden)
    stk_p = jnp.zeros((B_pad, D * W), jnp.float32).at[:B, :].set(stack.reshape(B, D * W))

    # ---- fused weight layouts -----------------------------------------------
    wcs = jnp.concatenate([params['wc'], params['ws']], axis=1)   # [H, 3+W]
    bcs = jnp.concatenate([params['bc'], params['bs']], axis=1)   # [1, 3+W]
    wih0 = _relayout_gate_weight(params['wih0'])                  # [E+W, 3H]
    wih0_e = wih0[:E]
    wih0_s = wih0[E:]
    whh0 = _relayout_gate_weight(params['whh0'])
    bih0 = _relayout_gate_bias(params['bih0'])
    bhh0 = _relayout_gate_bias(params['bhh0'])

    inputs = [tok_p, params['embedding'], hid_p, stk_p, wcs, bcs,
              wih0_e, wih0_s, whh0, bih0, bhh0]
    in_specs = [
        pl.BlockSpec((1, B_pad, 1), lambda t: (t, 0, 0)),     # tokens, streamed per step
        pl.BlockSpec((V, E), lambda t: (0, 0)),               # embedding table (resident)
        pl.BlockSpec((L, B_pad, H), lambda t: (0, 0, 0)),     # initial hidden
        pl.BlockSpec((B_pad, D * W), lambda t: (0, 0)),       # initial stack (lane-dense)
        pl.BlockSpec((H, 3 + W), lambda t: (0, 0)),
        pl.BlockSpec((1, 3 + W), lambda t: (0, 0)),
        pl.BlockSpec((E, 3 * H), lambda t: (0, 0)),
        pl.BlockSpec((W, 3 * H), lambda t: (0, 0)),
        pl.BlockSpec((H, 3 * H), lambda t: (0, 0)),
        pl.BlockSpec((1, 3 * H), lambda t: (0, 0)),
        pl.BlockSpec((1, 3 * H), lambda t: (0, 0)),
    ]
    for (wih, whh, bih, bhh) in params['layers']:
        inputs += [_relayout_gate_weight(wih), _relayout_gate_weight(whh),
                   _relayout_gate_bias(bih), _relayout_gate_bias(bhh)]
        in_specs += [pl.BlockSpec((H, 3 * H), lambda t: (0, 0)),
                     pl.BlockSpec((H, 3 * H), lambda t: (0, 0)),
                     pl.BlockSpec((1, 3 * H), lambda t: (0, 0)),
                     pl.BlockSpec((1, 3 * H), lambda t: (0, 0))]

    out_shapes = (
        jax.ShapeDtypeStruct((T, B_pad, H), jnp.float32),     # per-step GRU output
        jax.ShapeDtypeStruct((L, B_pad, H), jnp.float32),     # final hidden (resident state)
        jax.ShapeDtypeStruct((B_pad, D * W), jnp.float32),    # final stack  (resident state)
    )
    out_specs = [
        pl.BlockSpec((1, B_pad, H), lambda t: (t, 0, 0)),
        pl.BlockSpec((L, B_pad, H), lambda t: (0, 0, 0)),
        pl.BlockSpec((B_pad, D * W), lambda t: (0, 0)),
    ]

    outputs, hid_out, stk_out = pl.pallas_call(
        functools.partial(_stack_gru_seq_kernel, L, W),
        out_shape=out_shapes,
        grid_spec=pltpu.PrefetchScalarGridSpec(
            num_scalar_prefetch=0, grid=(T,),
            in_specs=in_specs, out_specs=out_specs),
        compiler_params=pltpu.CompilerParams(
            dimension_semantics=("arbitrary",)),   # time recurrence is sequential
    )(*inputs)

    return (outputs[:, :B, :],
            hid_out[:, :B, :],
            stk_out[:B, :].reshape(B, D, W))


def stack_gru_forward(params, input_token, hidden, stack):
    """Original single-step interface: input_token [1, B] -> (out [1,B,H], hidden, stack)."""
    return stack_gru_sequence(params, input_token, hidden, stack)


def stack_gru_reference(params, tokens, hidden, stack):
    """Pure-JAX reference: iterates the single-step StackGRU semantics."""
    T, B = tokens.shape
    all_wih = [params['wih0']] + [p[0] for p in params['layers']]
    all_whh = [params['whh0']] + [p[1] for p in params['layers']]
    all_bih = [params['bih0']] + [p[2] for p in params['layers']]
    all_bhh = [params['bhh0']] + [p[3] for p in params['layers']]
    outs = []
    for t in range(T):
        emb = params['embedding'][tokens[t]]
        h_last = hidden[-1]
        ctrl = jax.nn.softmax(h_last @ params['wc'] + params['bc'], axis=-1)
        stack_in = jnp.tanh(h_last @ params['ws'] + params['bs'])
        a_push = ctrl[:, 0][:, None, None]
        a_pop = ctrl[:, 1][:, None, None]
        a_noop = ctrl[:, 2][:, None, None]
        zeros = jnp.zeros((B, 1, STACK_WIDTH), jnp.float32)
        stack_down = jnp.concatenate([stack[:, 1:], zeros], axis=1)
        stack_up = jnp.concatenate([stack_in[:, None, :], stack[:, :-1]], axis=1)
        stack = a_noop * stack + a_push * stack_up + a_pop * stack_down
        stack_top = stack[:, 0, :]
        x = jnp.concatenate([emb, stack_top], axis=-1)
        new_hidden = []
        for l in range(N_LAYERS):
            h_prev = hidden[l]
            gi = [x @ all_wih[l][g] + all_bih[l][g] for g in range(3)]
            gh = [h_prev @ all_whh[l][g] + all_bhh[l][g] for g in range(3)]
            r = jax.nn.sigmoid(gi[0] + gh[0])
            z = jax.nn.sigmoid(gi[1] + gh[1])
            n = jnp.tanh(gi[2] + r * gh[2])
            h_new = (1.0 - z) * n + z * h_prev
            new_hidden.append(h_new)
            x = h_new
        hidden = jnp.stack(new_hidden)
        outs.append(x)
    return jnp.stack(outs), hidden, stack


if __name__ == "__main__":
    key = jax.random.PRNGKey(0)
    k_params, k_tok, k_hid, k_stack = jax.random.split(key, 4)
    params = init_params(k_params)

    tokens = jax.random.randint(k_tok, (SEQ_LEN, BATCH_SIZE), 0, VOCAB_SIZE, dtype=jnp.int32)
    hidden = 0.5 * jax.random.normal(k_hid, (N_LAYERS, BATCH_SIZE, RNN_CELL_SIZE), jnp.float32)
    stack = 0.5 * jax.random.normal(k_stack, (BATCH_SIZE, STACK_DEPTH, STACK_WIDTH), jnp.float32)

    outs, new_hidden, new_stack = stack_gru_sequence(params, tokens, hidden, stack)
    jax.block_until_ready((outs, new_hidden, new_stack))

    assert outs.shape == (SEQ_LEN, BATCH_SIZE, RNN_CELL_SIZE)
    assert new_hidden.shape == (N_LAYERS, BATCH_SIZE, RNN_CELL_SIZE)
    assert new_stack.shape == (BATCH_SIZE, STACK_DEPTH, STACK_WIDTH)

    ref_outs, ref_hidden, ref_stack = stack_gru_reference(params, tokens, hidden, stack)
    for got, ref in ((outs, ref_outs), (new_hidden, ref_hidden), (new_stack, ref_stack)):
        assert jnp.allclose(got, ref, atol=1e-2, rtol=1e-2), float(jnp.max(jnp.abs(got - ref)))

    # Single-step interface (original module forward semantics).
    one_out, one_hid, one_stack = stack_gru_forward(params, tokens[:1], hidden, stack)
    jax.block_until_ready((one_out, one_hid, one_stack))
    assert one_out.shape == (1, BATCH_SIZE, RNN_CELL_SIZE)
    assert one_hid.shape == (N_LAYERS, BATCH_SIZE, RNN_CELL_SIZE)
    assert one_stack.shape == (BATCH_SIZE, STACK_DEPTH, STACK_WIDTH)

    print("KERNEL_OK")
</pallas_src>

<mosaic_0001>
module attributes {stable_mosaic.version = 11 : i64} {
  func.func @_stack_gru_seq_kernel(%arg0: i32, %arg1: memref<1x8x1xi32, #tpu.memory_space<vmem>>, %arg2: memref<32x16xf32, #tpu.memory_space<vmem>>, %arg3: memref<2x8x32xf32, #tpu.memory_space<vmem>>, %arg4: memref<8x64xf32, #tpu.memory_space<vmem>>, %arg5: memref<32x11xf32, #tpu.memory_space<vmem>>, %arg6: memref<1x11xf32, #tpu.memory_space<vmem>>, %arg7: memref<16x96xf32, #tpu.memory_space<vmem>>, %arg8: memref<8x96xf32, #tpu.memory_space<vmem>>, %arg9: memref<32x96xf32, #tpu.memory_space<vmem>>, %arg10: memref<1x96xf32, #tpu.memory_space<vmem>>, %arg11: memref<1x96xf32, #tpu.memory_space<vmem>>, %arg12: memref<32x96xf32, #tpu.memory_space<vmem>>, %arg13: memref<32x96xf32, #tpu.memory_space<vmem>>, %arg14: memref<1x96xf32, #tpu.memory_space<vmem>>, %arg15: memref<1x96xf32, #tpu.memory_space<vmem>>, %arg16: memref<1x8x32xf32, #tpu.memory_space<vmem>>, %arg17: memref<2x8x32xf32, #tpu.memory_space<vmem>>, %arg18: memref<8x64xf32, #tpu.memory_space<vmem>>) attributes {dimension_semantics = [#tpu.dimension_semantics<arbitrary>], iteration_bounds = array<i64: 6>, scalar_prefetch = 0 : i64, scratch_operands = 0 : i64, tpu.core_type = #tpu.core_type<tc>, window_params = [{transform_indices = @transform_0, window_bounds = array<i64: 1, 8, 1>}, {pipeline_mode = #tpu.pipeline_mode<synchronous>, transform_indices = @transform_1, window_bounds = array<i64: 32, 16>}, {pipeline_mode = #tpu.pipeline_mode<synchronous>, transform_indices = @transform_2, window_bounds = array<i64: 2, 8, 32>}, {pipeline_mode = #tpu.pipeline_mode<synchronous>, transform_indices = @transform_3, window_bounds = array<i64: 8, 64>}, {pipeline_mode = #tpu.pipeline_mode<synchronous>, transform_indices = @transform_4, window_bounds = array<i64: 32, 11>}, {pipeline_mode = #tpu.pipeline_mode<synchronous>, transform_indices = @transform_5, window_bounds = array<i64: 1, 11>}, {pipeline_mode = #tpu.pipeline_mode<synchronous>, transform_indices = @transform_6, window_bounds = array<i64: 16, 96>}, {pipeline_mode = #tpu.pipeline_mode<synchronous>, transform_indices = @transform_7, window_bounds = array<i64: 8, 96>}, {pipeline_mode = #tpu.pipeline_mode<synchronous>, transform_indices = @transform_8, window_bounds = array<i64: 32, 96>}, {pipeline_mode = #tpu.pipeline_mode<synchronous>, transform_indices = @transform_9, window_bounds = array<i64: 1, 96>}, {pipeline_mode = #tpu.pipeline_mode<synchronous>, transform_indices = @transform_10, window_bounds = array<i64: 1, 96>}, {pipeline_mode = #tpu.pipeline_mode<synchronous>, transform_indices = @transform_11, window_bounds = array<i64: 32, 96>}, {pipeline_mode = #tpu.pipeline_mode<synchronous>, transform_indices = @transform_12, window_bounds = array<i64: 32, 96>}, {pipeline_mode = #tpu.pipeline_mode<synchronous>, transform_indices = @transform_13, window_bounds = array<i64: 1, 96>}, {pipeline_mode = #tpu.pipeline_mode<synchronous>, transform_indices = @transform_14, window_bounds = array<i64: 1, 96>}, {transform_indices = @transform_15, window_bounds = array<i64: 1, 8, 32>}, {pipeline_mode = #tpu.pipeline_mode<synchronous>, transform_indices = @transform_16, window_bounds = array<i64: 2, 8, 32>}, {pipeline_mode = #tpu.pipeline_mode<synchronous>, transform_indices = @transform_17, window_bounds = array<i64: 8, 64>}]} {
    %c0_i32 = arith.constant 0 : i32
    %0 = arith.cmpi eq, %arg0, %c0_i32 : i32
    %1 = arith.extui %0 : i1 to i32
    %c0_i32_0 = arith.constant 0 : i32
    %2 = arith.cmpi ne, %1, %c0_i32_0 : i32
    scf.if %2 {
      %c0_63 = arith.constant 0 : index
      %c0_64 = arith.constant 0 : index
      %c0_65 = arith.constant 0 : index
      %139 = vector.load %arg3[%c0_63, %c0_64, %c0_65] : memref<2x8x32xf32, #tpu.memory_space<vmem>>, vector<2x8x32xf32>
      %c0_66 = arith.constant 0 : index
      %c0_67 = arith.constant 0 : index
      %c0_68 = arith.constant 0 : index
      %140 = vector.load %arg17[%c0_66, %c0_67, %c0_68] : memref<2x8x32xf32, #tpu.memory_space<vmem>>, vector<2x8x32xf32>
      tpu.vector_store %arg17[%c0_66, %c0_67, %c0_68], %139 {strides = array<i32>} : memref<2x8x32xf32, #tpu.memory_space<vmem>>, vector<2x8x32xf32>,
      %c0_69 = arith.constant 0 : index
      %c0_70 = arith.constant 0 : index
      %141 = vector.load %arg4[%c0_69, %c0_70] : memref<8x64xf32, #tpu.memory_space<vmem>>, vector<8x64xf32>
      %c0_71 = arith.constant 0 : index
      %c0_72 = arith.constant 0 : index
      %142 = vector.load %arg18[%c0_71, %c0_72] : memref<8x64xf32, #tpu.memory_space<vmem>>, vector<8x64xf32>
      tpu.vector_store %arg18[%c0_71, %c0_72], %141 {strides = array<i32>} : memref<8x64xf32, #tpu.memory_space<vmem>>, vector<8x64xf32>,
    } else {
    }
    %c0 = arith.constant 0 : index
    %c0_1 = arith.constant 0 : index
    %c0_2 = arith.constant 0 : index
    %3 = vector.load %arg1[%c0, %c0_1, %c0_2] : memref<1x8x1xi32, #tpu.memory_space<vmem>>, vector<1x8x1xi32>
    %4 = vector.shape_cast %3 : vector<1x8x1xi32> to vector<8x1xi32>
    %5 = tpu.iota {dimensions = array<i32: 1>} : vector<8x32xi32>
    %6 = vector.broadcast %4 : vector<8x1xi32> to vector<8x32xi32>
    %7 = arith.cmpi eq, %5, %6 : vector<8x32xi32>
    %8 = arith.extui %7 : vector<8x32xi1> to vector<8x32xi32>
    %9 = arith.sitofp %8 : vector<8x32xi32> to vector<8x32xf32>
    %c0_3 = arith.constant 0 : index
    %c0_4 = arith.constant 0 : index
    %10 = vector.load %arg2[%c0_3, %c0_4] : memref<32x16xf32, #tpu.memory_space<vmem>>, vector<32x16xf32>
    %cst = arith.constant dense<0.000000e+00> : vector<8x16xf32>
    %11 = tpu.matmul %9, %10, %cst {dimension_numbers = #tpu.dot_dimension_numbers<[1], [0], [0], [1], [0, 0, 1, 1], [], []>} : vector<8x32xf32>, vector<32x16xf32>, vector<8x16xf32> -> vector<8x16xf32>
    %c1 = arith.constant 1 : index
    %c0_5 = arith.constant 0 : index
    %c0_6 = arith.constant 0 : index
    %12 = vector.load %arg17[%c1, %c0_5, %c0_6] : memref<2x8x32xf32, #tpu.memory_space<vmem>>, vector<1x8x32xf32>
    %13 = vector.shape_cast %12 : vector<1x8x32xf32> to vector<8x32xf32>
    %c0_7 = arith.constant 0 : index
    %c0_8 = arith.constant 0 : index
    %14 = vector.load %arg18[%c0_7, %c0_8] : memref<8x64xf32, #tpu.memory_space<vmem>>, vector<8x64xf32>
    %c0_9 = arith.constant 0 : index
    %c0_10 = arith.constant 0 : index
    %15 = vector.load %arg5[%c0_9, %c0_10] : memref<32x11xf32, #tpu.memory_space<vmem>>, vector<32x11xf32>
    %cst_11 = arith.constant dense<0.000000e+00> : vector<8x11xf32>
    %16 = tpu.matmul %13, %15, %cst_11 {dimension_numbers = #tpu.dot_dimension_numbers<[1], [0], [0], [1], [0, 0, 1, 1], [], []>} : vector<8x32xf32>, vector<32x11xf32>, vector<8x11xf32> -> vector<8x11xf32>
    %c0_12 = arith.constant 0 : index
    %c0_13 = arith.constant 0 : index
    %17 = vector.load %arg6[%c0_12, %c0_13] : memref<1x11xf32, #tpu.memory_space<vmem>>, vector<1x11xf32>
    %18 = vector.broadcast %17 : vector<1x11xf32> to vector<8x11xf32>
    %19 = arith.addf %16, %18 : vector<8x11xf32>
    %20 = vector.extract_strided_slice %19 {offsets = [0, 0], sizes = [8, 3], strides = [1, 1]} : vector<8x11xf32> to vector<8x3xf32>
    %cst_14 = arith.constant dense<0xFF800000> : vector<8xf32>
    %21 = vector.multi_reduction <maximumf>, %20, %cst_14 [1] : vector<8x3xf32> to vector<8xf32>
    %22 = vector.shape_cast %21 : vector<8xf32> to vector<8x1xf32>
    %23 = vector.broadcast %22 : vector<8x1xf32> to vector<8x3xf32>
    %24 = arith.subf %20, %23 : vector<8x3xf32>
    %25 = math.exp %24 : vector<8x3xf32>
    %cst_15 = arith.constant dense<0.000000e+00> : vector<8xf32>
    %26 = vector.multi_reduction <add>, %25, %cst_15 [1] : vector<8x3xf32> to vector<8xf32>
    %27 = vector.shape_cast %26 : vector<8xf32> to vector<8x1xf32>
    %28 = tpu.reciprocal %27 {approx = true} : vector<8x1xf32> -> vector<8x1xf32>
    %29 = vector.broadcast %28 : vector<8x1xf32> to vector<8x3xf32>
    %30 = arith.mulf %25, %29 : vector<8x3xf32>
    %31 = vector.extract_strided_slice %19 {offsets = [0, 3], sizes = [8, 8], strides = [1, 1]} : vector<8x11xf32> to vector<8x8xf32>
    %32 = math.tanh %31 : vector<8x8xf32>
    %33 = vector.extract_strided_slice %30 {offsets = [0, 0], sizes = [8, 1], strides = [1, 1]} : vector<8x3xf32> to vector<8x1xf32>
    %34 = vector.extract_strided_slice %30 {offsets = [0, 1], sizes = [8, 1], strides = [1, 1]} : vector<8x3xf32> to vector<8x1xf32>
    %35 = vector.extract_strided_slice %30 {offsets = [0, 2], sizes = [8, 1], strides = [1, 1]} : vector<8x3xf32> to vector<8x1xf32>
    %cst_16 = arith.constant 0.000000e+00 : f32
    %36 = vector.broadcast %cst_16 : f32 to vector<8x8xf32>
    %37 = vector.extract_strided_slice %14 {offsets = [0, 8], sizes = [8, 56], strides = [1, 1]} : vector<8x64xf32> to vector<8x56xf32>
    %38 = tpu.concatenate %37, %36 in 1 : vector<8x56xf32>, vector<8x8xf32> -> vector<8x64xf32>
    %39 = vector.extract_strided_slice %14 {offsets = [0, 0], sizes = [8, 56], strides = [1, 1]} : vector<8x64xf32> to vector<8x56xf32>
    %40 = tpu.concatenate %32, %39 in 1 : vector<8x8xf32>, vector<8x56xf32> -> vector<8x64xf32>
    %41 = vector.broadcast %35 : vector<8x1xf32> to vector<8x64xf32>
    %42 = arith.mulf %41, %14 : vector<8x64xf32>
    %43 = vector.broadcast %33 : vector<8x1xf32> to vector<8x64xf32>
    %44 = arith.mulf %43, %40 : vector<8x64xf32>
    %45 = arith.addf %42, %44 : vector<8x64xf32>
    %46 = vector.broadcast %34 : vector<8x1xf32> to vector<8x64xf32>
    %47 = arith.mulf %46, %38 : vector<8x64xf32>
    %48 = arith.addf %45, %47 : vector<8x64xf32>
    %c0_17 = arith.constant 0 : index
    %c0_18 = arith.constant 0 : index
    %49 = vector.load %arg18[%c0_17, %c0_18] : memref<8x64xf32, #tpu.memory_space<vmem>>, vector<8x64xf32>
    tpu.vector_store %arg18[%c0_17, %c0_18], %48 {strides = array<i32>} : memref<8x64xf32, #tpu.memory_space<vmem>>, vector<8x64xf32>,
    %50 = vector.extract_strided_slice %48 {offsets = [0, 0], sizes = [8, 8], strides = [1, 1]} : vector<8x64xf32> to vector<8x8xf32>
    %c0_19 = arith.constant 0 : index
    %c0_20 = arith.constant 0 : index
    %c0_21 = arith.constant 0 : index
    %51 = vector.load %arg17[%c0_19, %c0_20, %c0_21] : memref<2x8x32xf32, #tpu.memory_space<vmem>>, vector<1x8x32xf32>
    %52 = vector.shape_cast %51 : vector<1x8x32xf32> to vector<8x32xf32>
    %c0_22 = arith.constant 0 : index
    %c0_23 = arith.constant 0 : index
    %53 = vector.load %arg7[%c0_22, %c0_23] : memref<16x96xf32, #tpu.memory_space<vmem>>, vector<16x96xf32>
    %cst_24 = arith.constant dense<0.000000e+00> : vector<8x96xf32>
    %54 = tpu.matmul %11, %53, %cst_24 {dimension_numbers = #tpu.dot_dimension_numbers<[1], [0], [0], [1], [0, 0, 1, 1], [], []>} : vector<8x16xf32>, vector<16x96xf32>, vector<8x96xf32> -> vector<8x96xf32>
    %c0_25 = arith.constant 0 : index
    %c0_26 = arith.constant 0 : index
    %55 = vector.load %arg8[%c0_25, %c0_26] : memref<8x96xf32, #tpu.memory_space<vmem>>, vector<8x96xf32>
    %cst_27 = arith.constant dense<0.000000e+00> : vector<8x96xf32>
    %56 = tpu.matmul %50, %55, %cst_27 {dimension_numbers = #tpu.dot_dimension_numbers<[1], [0], [0], [1], [0, 0, 1, 1], [], []>} : vector<8x8xf32>, vector<8x96xf32>, vector<8x96xf32> -> vector<8x96xf32>
    %57 = arith.addf %54, %56 : vector<8x96xf32>
    %c0_28 = arith.constant 0 : index
    %c0_29 = arith.constant 0 : index
    %58 = vector.load %arg10[%c0_28, %c0_29] : memref<1x96xf32, #tpu.memory_space<vmem>>, vector<1x96xf32>
    %59 = vector.broadcast %58 : vector<1x96xf32> to vector<8x96xf32>
    %60 = arith.addf %57, %59 : vector<8x96xf32>
    %c0_30 = arith.constant 0 : index
    %c0_31 = arith.constant 0 : index
    %61 = vector.load %arg9[%c0_30, %c0_31] : memref<32x96xf32, #tpu.memory_space<vmem>>, vector<32x96xf32>
    %cst_32 = arith.constant dense<0.000000e+00> : vector<8x96xf32>
    %62 = tpu.matmul %52, %61, %cst_32 {dimension_numbers = #tpu.dot_dimension_numbers<[1], [0], [0], [1], [0, 0, 1, 1], [], []>} : vector<8x32xf32>, vector<32x96xf32>, vector<8x96xf32> -> vector<8x96xf32>
    %c0_33 = arith.constant 0 : index
    %c0_34 = arith.constant 0 : index
    %63 = vector.load %arg11[%c0_33, %c0_34] : memref<1x96xf32, #tpu.memory_space<vmem>>, vector<1x96xf32>
    %64 = vector.broadcast %63 : vector<1x96xf32> to vector<8x96xf32>
    %65 = arith.addf %62, %64 : vector<8x96xf32>
    %66 = vector.extract_strided_slice %60 {offsets = [0, 0], sizes = [8, 32], strides = [1, 1]} : vector<8x96xf32> to vector<8x32xf32>
    %67 = vector.extract_strided_slice %65 {offsets = [0, 0], sizes = [8, 32], strides = [1, 1]} : vector<8x96xf32> to vector<8x32xf32>
    %68 = arith.addf %66, %67 : vector<8x32xf32>
    %69 = arith.negf %68 : vector<8x32xf32>
    %70 = math.exp %69 : vector<8x32xf32>
    %cst_35 = arith.constant 1.000000e+00 : f32
    %71 = vector.broadcast %cst_35 : f32 to vector<8x32xf32>
    %72 = arith.addf %71, %70 : vector<8x32xf32>
    %73 = arith.divf %71, %72 : vector<8x32xf32>
    %74 = vector.extract_strided_slice %60 {offsets = [0, 32], sizes = [8, 32], strides = [1, 1]} : vector<8x96xf32> to vector<8x32xf32>
    %75 = vector.extract_strided_slice %65 {offsets = [0, 32], sizes = [8, 32], strides = [1, 1]} : vector<8x96xf32> to vector<8x32xf32>
    %76 = arith.addf %74, %75 : vector<8x32xf32>
    %77 = arith.negf %76 : vector<8x32xf32>
    %78 = math.exp %77 : vector<8x32xf32>
    %cst_36 = arith.constant 1.000000e+00 : f32
    %79 = vector.broadcast %cst_36 : f32 to vector<8x32xf32>
    %80 = arith.addf %79, %78 : vector<8x32xf32>
    %81 = arith.divf %79, %80 : vector<8x32xf32>
    %82 = vector.extract_strided_slice %60 {offsets = [0, 64], sizes = [8, 32], strides = [1, 1]} : vector<8x96xf32> to vector<8x32xf32>
    %83 = vector.extract_strided_slice %65 {offsets = [0, 64], sizes = [8, 32], strides = [1, 1]} : vector<8x96xf32> to vector<8x32xf32>
    %84 = arith.mulf %73, %83 : vector<8x32xf32>
    %85 = arith.addf %82, %84 : vector<8x32xf32>
    %86 = math.tanh %85 : vector<8x32xf32>
    %cst_37 = arith.constant 1.000000e+00 : f32
    %87 = vector.broadcast %cst_37 : f32 to vector<8x32xf32>
    %88 = arith.subf %87, %81 : vector<8x32xf32>
    %89 = arith.mulf %88, %86 : vector<8x32xf32>
    %90 = arith.mulf %81, %52 : vector<8x32xf32>
    %91 = arith.addf %89, %90 : vector<8x32xf32>
    %c0_38 = arith.constant 0 : index
    %c0_39 = arith.constant 0 : index
    %c0_40 = arith.constant 0 : index
    %92 = vector.load %arg17[%c0_38, %c0_39, %c0_40] : memref<2x8x32xf32, #tpu.memory_space<vmem>>, vector<1x8x32xf32>
    %93 = vector.shape_cast %92 : vector<1x8x32xf32> to vector<8x32xf32>
    %94 = vector.shape_cast %91 : vector<8x32xf32> to vector<1x8x32xf32>
    tpu.vector_store %arg17[%c0_38, %c0_39, %c0_40], %94 {strides = array<i32>} : memref<2x8x32xf32, #tpu.memory_space<vmem>>, vector<1x8x32xf32>,
    %c1_41 = arith.constant 1 : index
    %c0_42 = arith.constant 0 : index
    %c0_43 = arith.constant 0 : index
    %95 = vector.load %arg17[%c1_41, %c0_42, %c0_43] : memref<2x8x32xf32, #tpu.memory_space<vmem>>, vector<1x8x32xf32>
    %96 = vector.shape_cast %95 : vector<1x8x32xf32> to vector<8x32xf32>
    %c0_44 = arith.constant 0 : index
    %c0_45 = arith.constant 0 : index
    %97 = vector.load %arg12[%c0_44, %c0_45] : memref<32x96xf32, #tpu.memory_space<vmem>>, vector<32x96xf32>
    %cst_46 = arith.constant dense<0.000000e+00> : vector<8x96xf32>
    %98 = tpu.matmul %91, %97, %cst_46 {dimension_numbers = #tpu.dot_dimension_numbers<[1], [0], [0], [1], [0, 0, 1, 1], [], []>} : vector<8x32xf32>, vector<32x96xf32>, vector<8x96xf32> -> vector<8x96xf32>
    %c0_47 = arith.constant 0 : index
    %c0_48 = arith.constant 0 : index
    %99 = vector.load %arg14[%c0_47, %c0_48] : memref<1x96xf32, #tpu.memory_space<vmem>>, vector<1x96xf32>
    %100 = vector.broadcast %99 : vector<1x96xf32> to vector<8x96xf32>
    %101 = arith.addf %98, %100 : vector<8x96xf32>
    %c0_49 = arith.constant 0 : index
    %c0_50 = arith.constant 0 : index
    %102 = vector.load %arg13[%c0_49, %c0_50] : memref<32x96xf32, #tpu.memory_space<vmem>>, vector<32x96xf32>
    %cst_51 = arith.constant dense<0.000000e+00> : vector<8x96xf32>
    %103 = tpu.matmul %96, %102, %cst_51 {dimension_numbers = #tpu.dot_dimension_numbers<[1], [0], [0], [1], [0, 0, 1, 1], [], []>} : vector<8x32xf32>, vector<32x96xf32>, vector<8x96xf32> -> vector<8x96xf32>
    %c0_52 = arith.constant 0 : index
    %c0_53 = arith.constant 0 : index
    %104 = vector.load %arg15[%c0_52, %c0_53] : memref<1x96xf32, #tpu.memory_space<vmem>>, vector<1x96xf32>
    %105 = vector.broadcast %104 : vector<1x96xf32> to vector<8x96xf32>
    %106 = arith.addf %103, %105 : vector<8x96xf32>
    %107 = vector.extract_strided_slice %101 {offsets = [0, 0], sizes = [8, 32], strides = [1, 1]} : vector<8x96xf32> to vector<8x32xf32>
    %108 = vector.extract_strided_slice %106 {offsets = [0, 0], sizes = [8, 32], strides = [1, 1]} : vector<8x96xf32> to vector<8x32xf32>
    %109 = arith.addf %107, %108 : vector<8x32xf32>
    %110 = arith.negf %109 : vector<8x32xf32>
    %111 = math.exp %110 : vector<8x32xf32>
    %cst_54 = arith.constant 1.000000e+00 : f32
    %112 = vector.broadcast %cst_54 : f32 to vector<8x32xf32>
    %113 = arith.addf %112, %111 : vector<8x32xf32>
    %114 = arith.divf %112, %113 : vector<8x32xf32>
    %115 = vector.extract_strided_slice %101 {offsets = [0, 32], sizes = [8, 32], strides = [1, 1]} : vector<8x96xf32> to vector<8x32xf32>
    %116 = vector.extract_strided_slice %106 {offsets = [0, 32], sizes = [8, 32], strides = [1, 1]} : vector<8x96xf32> to vector<8x32xf32>
    %117 = arith.addf %115, %116 : vector<8x32xf32>
    %118 = arith.negf %117 : vector<8x32xf32>
    %119 = math.exp %118 : vector<8x32xf32>
    %cst_55 = arith.constant 1.000000e+00 : f32
    %120 = vector.broadcast %cst_55 : f32 to vector<8x32xf32>
    %121 = arith.addf %120, %119 : vector<8x32xf32>
    %122 = arith.divf %120, %121 : vector<8x32xf32>
    %123 = vector.extract_strided_slice %101 {offsets = [0, 64], sizes = [8, 32], strides = [1, 1]} : vector<8x96xf32> to vector<8x32xf32>
    %124 = vector.extract_strided_slice %106 {offsets = [0, 64], sizes = [8, 32], strides = [1, 1]} : vector<8x96xf32> to vector<8x32xf32>
    %125 = arith.mulf %114, %124 : vector<8x32xf32>
    %126 = arith.addf %123, %125 : vector<8x32xf32>
    %127 = math.tanh %126 : vector<8x32xf32>
    %cst_56 = arith.constant 1.000000e+00 : f32
    %128 = vector.broadcast %cst_56 : f32 to vector<8x32xf32>
    %129 = arith.subf %128, %122 : vector<8x32xf32>
    %130 = arith.mulf %129, %127 : vector<8x32xf32>
    %131 = arith.mulf %122, %96 : vector<8x32xf32>
    %132 = arith.addf %130, %131 : vector<8x32xf32>
    %c1_57 = arith.constant 1 : index
    %c0_58 = arith.constant 0 : index
    %c0_59 = arith.constant 0 : index
    %133 = vector.load %arg17[%c1_57, %c0_58, %c0_59] : memref<2x8x32xf32, #tpu.memory_space<vmem>>, vector<1x8x32xf32>
    %134 = vector.shape_cast %133 : vector<1x8x32xf32> to vector<8x32xf32>
    %135 = vector.shape_cast %132 : vector<8x32xf32> to vector<1x8x32xf32>
    tpu.vector_store %arg17[%c1_57, %c0_58, %c0_59], %135 {strides = array<i32>} : memref<2x8x32xf32, #tpu.memory_space<vmem>>, vector<1x8x32xf32>,
    %c0_60 = arith.constant 0 : index
    %c0_61 = arith.constant 0 : index
    %c0_62 = arith.constant 0 : index
    %136 = vector.load %arg16[%c0_60, %c0_61, %c0_62] : memref<1x8x32xf32, #tpu.memory_space<vmem>>, vector<1x8x32xf32>
    %137 = vector.shape_cast %136 : vector<1x8x32xf32> to vector<8x32xf32>
    %138 = vector.shape_cast %132 : vector<8x32xf32> to vector<1x8x32xf32>
    tpu.vector_store %arg16[%c0_60, %c0_61, %c0_62], %138 {strides = array<i32>} : memref<1x8x32xf32, #tpu.memory_space<vmem>>, vector<1x8x32xf32>,
    return
  }
  func.func @transform_0(%arg0: i32) -> (i32, i32, i32) {
    %c0_i32 = arith.constant 0 : i32
    %c0_i32_0 = arith.constant 0 : i32
    %c0_i32_1 = arith.constant 0 : i32
    return %arg0, %c0_i32, %c0_i32_0 : i32, i32, i32
  }
  func.func @transform_1(%arg0: i32) -> (i32, i32) {
    %c0_i32 = arith.constant 0 : i32
    %c0_i32_0 = arith.constant 0 : i32
    %c0_i32_1 = arith.constant 0 : i32
    return %c0_i32, %c0_i32_0 : i32, i32
  }
  func.func @transform_2(%arg0: i32) -> (i32, i32, i32) {
    %c0_i32 = arith.constant 0 : i32
    %c0_i32_0 = arith.constant 0 : i32
    %c0_i32_1 = arith.constant 0 : i32
    %c0_i32_2 = arith.constant 0 : i32
    return %c0_i32, %c0_i32_0, %c0_i32_1 : i32, i32, i32
  }
  func.func @transform_3(%arg0: i32) -> (i32, i32) {
    %c0_i32 = arith.constant 0 : i32
    %c0_i32_0 = arith.constant 0 : i32
    %c0_i32_1 = arith.constant 0 : i32
    return %c0_i32, %c0_i32_0 : i32, i32
  }
  func.func @transform_4(%arg0: i32) -> (i32, i32) {
    %c0_i32 = arith.constant 0 : i32
    %c0_i32_0 = arith.constant 0 : i32
    %c0_i32_1 = arith.constant 0 : i32
    return %c0_i32, %c0_i32_0 : i32, i32
  }
  func.func @transform_5(%arg0: i32) -> (i32, i32) {
    %c0_i32 = arith.constant 0 : i32
    %c0_i32_0 = arith.constant 0 : i32
    %c0_i32_1 = arith.constant 0 : i32
    return %c0_i32, %c0_i32_0 : i32, i32
  }
  func.func @transform_6(%arg0: i32) -> (i32, i32) {
    %c0_i32 = arith.constant 0 : i32
    %c0_i32_0 = arith.constant 0 : i32
    %c0_i32_1 = arith.constant 0 : i32
    return %c0_i32, %c0_i32_0 : i32, i32
  }
  func.func @transform_7(%arg0: i32) -> (i32, i32) {
    %c0_i32 = arith.constant 0 : i32
    %c0_i32_0 = arith.constant 0 : i32
    %c0_i32_1 = arith.constant 0 : i32
    return %c0_i32, %c0_i32_0 : i32, i32
  }
  func.func @transform_8(%arg0: i32) -> (i32, i32) {
    %c0_i32 = arith.constant 0 : i32
    %c0_i32_0 = arith.constant 0 : i32
    %c0_i32_1 = arith.constant 0 : i32
    return %c0_i32, %c0_i32_0 : i32, i32
  }
  func.func @transform_9(%arg0: i32) -> (i32, i32) {
    %c0_i32 = arith.constant 0 : i32
    %c0_i32_0 = arith.constant 0 : i32
    %c0_i32_1 = arith.constant 0 : i32
    return %c0_i32, %c0_i32_0 : i32, i32
  }
  func.func @transform_10(%arg0: i32) -> (i32, i32) {
    %c0_i32 = arith.constant 0 : i32
    %c0_i32_0 = arith.constant 0 : i32
    %c0_i32_1 = arith.constant 0 : i32
    return %c0_i32, %c0_i32_0 : i32, i32
  }
  func.func @transform_11(%arg0: i32) -> (i32, i32) {
    %c0_i32 = arith.constant 0 : i32
    %c0_i32_0 = arith.constant 0 : i32
    %c0_i32_1 = arith.constant 0 : i32
    return %c0_i32, %c0_i32_0 : i32, i32
  }
  func.func @transform_12(%arg0: i32) -> (i32, i32) {
    %c0_i32 = arith.constant 0 : i32
    %c0_i32_0 = arith.constant 0 : i32
    %c0_i32_1 = arith.constant 0 : i32
    return %c0_i32, %c0_i32_0 : i32, i32
  }
  func.func @transform_13(%arg0: i32) -> (i32, i32) {
    %c0_i32 = arith.constant 0 : i32
    %c0_i32_0 = arith.constant 0 : i32
    %c0_i32_1 = arith.constant 0 : i32
    return %c0_i32, %c0_i32_0 : i32, i32
  }
  func.func @transform_14(%arg0: i32) -> (i32, i32) {
    %c0_i32 = arith.constant 0 : i32
    %c0_i32_0 = arith.constant 0 : i32
    %c0_i32_1 = arith.constant 0 : i32
    return %c0_i32, %c0_i32_0 : i32, i32
  }
  func.func @transform_15(%arg0: i32) -> (i32, i32, i32) {
    %c0_i32 = arith.constant 0 : i32
    %c0_i32_0 = arith.constant 0 : i32
    %c0_i32_1 = arith.constant 0 : i32
    return %arg0, %c0_i32, %c0_i32_0 : i32, i32, i32
  }
  func.func @transform_16(%arg0: i32) -> (i32, i32, i32) {
    %c0_i32 = arith.constant 0 : i32
    %c0_i32_0 = arith.constant 0 : i32
    %c0_i32_1 = arith.constant 0 : i32
    %c0_i32_2 = arith.constant 0 : i32
    return %c0_i32, %c0_i32_0, %c0_i32_1 : i32, i32, i32
  }
  func.func @transform_17(%arg0: i32) -> (i32, i32) {
    %c0_i32 = arith.constant 0 : i32
    %c0_i32_0 = arith.constant 0 : i32
    %c0_i32_1 = arith.constant 0 : i32
    return %c0_i32, %c0_i32_0 : i32, i32
  }
}

</mosaic_0001>

<llo_original>
// kernel: tpu_custom_call.1
$region0: #{tpu_custom_call.1}
  #allocation0 [shape = 'u32[]', space=smem, size = 0x4, offset = 0x4, fixed_abs, tag = 'smem constant byte address 0x4 - core index']
  #allocation1 [shape = 'u32[144,128]{1,0:T(1,128)}', space=vmem, size = 0x12000, scoped, tag = 'internal scratch']
  %s0 = inlined_call_operand.vmem [shape: s32[6,8,1], index: 0, kind: input, shape index: {}]
  %s1 = inlined_call_operand.vmem [shape: f32[32,16], index: 1, kind: input, shape index: {}]
  %s2 = inlined_call_operand.vmem [shape: f32[2,8,32], index: 2, kind: input, shape index: {}]
  %s3 = inlined_call_operand.vmem [shape: f32[8,64], index: 3, kind: input, shape index: {}]
  %s4 = inlined_call_operand.vmem [shape: f32[32,11], index: 4, kind: input, shape index: {}]
  %s5 = inlined_call_operand.vmem [shape: f32[1,11], index: 5, kind: input, shape index: {}]
  %s6 = inlined_call_operand.vmem [shape: f32[16,96], index: 6, kind: input, shape index: {}]
  %s7 = inlined_call_operand.vmem [shape: f32[8,96], index: 7, kind: input, shape index: {}]
  %s8 = inlined_call_operand.vmem [shape: f32[32,96], index: 8, kind: input, shape index: {}]
  %s9 = inlined_call_operand.vmem [shape: f32[1,96], index: 9, kind: input, shape index: {}]
  %s10 = inlined_call_operand.vmem [shape: f32[1,96], index: 10, kind: input, shape index: {}]
  %s11 = inlined_call_operand.vmem [shape: f32[32,96], index: 11, kind: input, shape index: {}]
  %s12 = inlined_call_operand.vmem [shape: f32[32,96], index: 12, kind: input, shape index: {}]
  %s13 = inlined_call_operand.vmem [shape: f32[1,96], index: 13, kind: input, shape index: {}]
  %s14 = inlined_call_operand.vmem [shape: f32[1,96], index: 14, kind: input, shape index: {}]
  %s15 = inlined_call_operand.hbm [shape: f32[6,8,32], index: 15, kind: output, shape index: {0}]
  %s16 = inlined_call_operand.hbm [shape: f32[2,8,32], index: 16, kind: output, shape index: {1}]
  %s17 = inlined_call_operand.hbm [shape: f32[8,64], index: 17, kind: output, shape index: {2}]
  %18 = xla_tuple %s15, %s16, %s17
  %s19 = sld [smem:[#allocation0]]
  $region113: #{tpu_custom_call.1} parent=0
    _
  %s21 = ssub.s32 1, %s19
  %s22 = scalar_select 0, %s21, %s19
  $region1: #{tpu_custom_call.1} parent=0
    #allocation2 [shape = 'u8[8192]{0}', space=vmem, size = 0x2000, scoped, tag = 'output window, operand 0']
    #allocation3 [shape = 's32[2]{0}', space=sflag, size = 0x8, scoped, tag = 'scoped memory for tpu_custom_call.1']
    #allocation4 [shape = 'u8[8192]{0}', space=vmem, size = 0x2000, scoped, tag = 'output window, operand 1, single buffered']
    #allocation5 [shape = 's32[1]{0}', space=sflag, size = 0x4, scoped, tag = 'scoped memory for tpu_custom_call.1']
    #allocation6 [shape = 'u8[4096]{0}', space=vmem, size = 0x1000, scoped, tag = 'output window, operand 2, single buffered']
    %23 = vsyncpa [#allocation3], 0
    %s24 = scalar_lea.sflag [#allocation3], 1
    %25 = vsyncpa %s24, 0
    %26 = vsyncpa [#allocation5], 0
    loop: start=0, step=1, limit=8
    $region2: #{tpu_custom_call.1} parent=1 // loop_pre_header
      _
    $region3: #{tpu_custom_call.1} parent=1 // loop_header
      %s28 = sphi 0, %s32
      %p29 = scmp.ge.s32.totalorder %s28, 8
      %s38 = sphi 0, %s40
      %s41 = sphi 0, %s38
      %s42 = sphi 0, %s41
      %s58 = sphi 0, %s42
      %s62 = sphi 0, %s62
      %s64 = sphi 0, %s62
      %s65 = sphi 0, %s64
      %s79 = sphi 0, %s65
      %s83 = sphi 0, %s83
      %s85 = sphi 0, %s83
      %s86 = sphi 0, %s85
      %s100 = sphi 0, %s86
      %s104 = sphi 0, %s104
      %s106 = sphi 0, %s104
      %s107 = sphi 0, %s106
      %s121 = sphi 0, %s107
      %s125 = sphi 0, %s125
      %s127 = sphi 0, %s125
      %s128 = sphi 0, %s127
      %s142 = sphi 0, %s128
      %s146 = sphi 0, %s146
      %s148 = sphi 0, %s146
      %s149 = sphi 0, %s148
      %s163 = sphi 0, %s149
      %s167 = sphi 0, %s167
      %s169 = sphi 0, %s167
      %s170 = sphi 0, %s169
      %s184 = sphi 0, %s170
      %s188 = sphi 0, %s188
      %s190 = sphi 0, %s188
      %s191 = sphi 0, %s190
      %s205 = sphi 0, %s191
      %s209 = sphi 0, %s209
      %s211 = sphi 0, %s209
      %s212 = sphi 0, %s211
      %s226 = sphi 0, %s212
      %s230 = sphi 0, %s230
      %s232 = sphi 0, %s230
      %s233 = sphi 0, %s232
      %s247 = sphi 0, %s233
      %s251 = sphi 0, %s251
      %s253 = sphi 0, %s251
      %s254 = sphi 0, %s253
      %s268 = sphi 0, %s254
      %s272 = sphi 0, %s272
      %s274 = sphi 0, %s272
      %s275 = sphi 0, %s274
      %s289 = sphi 0, %s275
      %s293 = sphi 0, %s293
      %s295 = sphi 0, %s293
      %s296 = sphi 0, %s295
      %s310 = sphi 0, %s296
      %s314 = sphi 0, %s314
      %s316 = sphi 0, %s314
      %s317 = sphi 0, %s316
      %s331 = sphi 0, %s317
      %s335 = sphi 0, %s335
      %s337 = sphi 0, %s335
      %s338 = sphi 0, %s337
      %s352 = sphi 0, %s338
      %s358 = sphi 0, %s360
      %s361 = sphi 0, %s358
      %s362 = sphi 0, %s361
      %s378 = sphi 0, %s362
      %s382 = sphi 0, %s382
      %s384 = sphi 0, %s382
      %s385 = sphi 0, %s384
      %s399 = sphi 0, %s385
      %s403 = sphi 0, %s403
      %s405 = sphi 0, %s403
      %s406 = sphi 0, %s405
      %s420 = sphi 0, %s406
    $region4: #{tpu_custom_call.1} parent=1 // loop_header_branch
      %31 = sbr.rel (%p29) target = $region8
    $region5: #{tpu_custom_call.1} parent=1 // loop_body
      %s33 = ssub.s32 %s28, 1
      %s34 = ssub.s32 %s28, 2
      %s35 = sadd.s32 %s28, 1
      %s36 = ssub.s32 %s28, %s35
      %p37 = scmp.eq.s32.totalorder %s36, 0
      %s39 = sadd.s32 %s38, 1
      %s40 = scalar_select %p37, %s38, %s39
      %p43 = pneg %p37
      %p44 = scmp.eq.s32.totalorder %s28, 5
      %p45 = por %p43, %p44
      %p46 = scmp.ne.s32.totalorder %s38, %s41
      %p47 = scmp.eq.s32.totalorder %s28, 0
      %p48 = por %p46, %p47
      %p49 = scmp.ne.s32.totalorder %s38, %s41
      %p50 = scmp.eq.s32.totalorder %s33, 5
      %p51 = por %p49, %p50
      %p52 = scmp.ne.s32.totalorder %s41, %s42
      %p53 = scmp.eq.s32.totalorder %s33, 0
      %p54 = por %p52, %p53
      %p55 = scmp.ne.s32.totalorder %s41, %s42
      %p56 = scmp.eq.s32.totalorder %s34, 5
      %p57 = por %p55, %p56
      %p59 = scmp.ne.s32.totalorder %s42, %s58
      %p60 = scmp.eq.s32.totalorder %s34, 0
      %p61 = por %p59, %p60
      %s63 = sadd.s32 %s62, 1
      %p66 = scmp.eq.s32.totalorder %s28, 5
      %p67 = scmp.ne.s32.totalorder %s62, %s64
      %p68 = scmp.eq.s32.totalorder %s28, 0
      %p69 = por %p67, %p68
      %p70 = scmp.ne.s32.totalorder %s62, %s64
      %p71 = scmp.eq.s32.totalorder %s33, 5
      %p72 = por %p70, %p71
      %p73 = scmp.ne.s32.totalorder %s64, %s65
      %p74 = scmp.eq.s32.totalorder %s33, 0
      %p75 = por %p73, %p74
      %p76 = scmp.ne.s32.totalorder %s64, %s65
      %p77 = scmp.eq.s32.totalorder %s34, 5
      %p78 = por %p76, %p77
      %p80 = scmp.ne.s32.totalorder %s65, %s79
      %p81 = scmp.eq.s32.totalorder %s34, 0
      %p82 = por %p80, %p81
      %s84 = sadd.s32 %s83, 1
      %p87 = scmp.eq.s32.totalorder %s28, 5
      %p88 = scmp.ne.s32.totalorder %s83, %s85
      %p89 = scmp.eq.s32.totalorder %s28, 0
      %p90 = por %p88, %p89
      %p91 = scmp.ne.s32.totalorder %s83, %s85
      %p92 = scmp.eq.s32.totalorder %s33, 5
      %p93 = por %p91, %p92
      %p94 = scmp.ne.s32.totalorder %s85, %s86
      %p95 = scmp.eq.s32.totalorder %s33, 0
      %p96 = por %p94, %p95
      %p97 = scmp.ne.s32.totalorder %s85, %s86
      %p98 = scmp.eq.s32.totalorder %s34, 5
      %p99 = por %p97, %p98
      %p101 = scmp.ne.s32.totalorder %s86, %s100
      %p102 = scmp.eq.s32.totalorder %s34, 0
      %p103 = por %p101, %p102
      %s105 = sadd.s32 %s104, 1
      %p108 = scmp.eq.s32.totalorder %s28, 5
      %p109 = scmp.ne.s32.totalorder %s104, %s106
      %p110 = scmp.eq.s32.totalorder %s28, 0
      %p111 = por %p109, %p110
      %p112 = scmp.ne.s32.totalorder %s104, %s106
      %p113 = scmp.eq.s32.totalorder %s33, 5
      %p114 = por %p112, %p113
      %p115 = scmp.ne.s32.totalorder %s106, %s107
      %p116 = scmp.eq.s32.totalorder %s33, 0
      %p117 = por %p115, %p116
      %p118 = scmp.ne.s32.totalorder %s106, %s107
      %p119 = scmp.eq.s32.totalorder %s34, 5
      %p120 = por %p118, %p119
      %p122 = scmp.ne.s32.totalorder %s107, %s121
      %p123 = scmp.eq.s32.totalorder %s34, 0
      %p124 = por %p122, %p123
      %s126 = sadd.s32 %s125, 1
      %p129 = scmp.eq.s32.totalorder %s28, 5
      %p130 = scmp.ne.s32.totalorder %s125, %s127
      %p131 = scmp.eq.s32.totalorder %s28, 0
      %p132 = por %p130, %p131
      %p133 = scmp.ne.s32.totalorder %s125, %s127
      %p134 = scmp.eq.s32.totalorder %s33, 5
      %p135 = por %p133, %p134
      %p136 = scmp.ne.s32.totalorder %s127, %s128
      %p137 = scmp.eq.s32.totalorder %s33, 0
      %p138 = por %p136, %p137
      %p139 = scmp.ne.s32.totalorder %s127, %s128
      %p140 = scmp.eq.s32.totalorder %s34, 5
      %p141 = por %p139, %p140
      %p143 = scmp.ne.s32.totalorder %s128, %s142
      %p144 = scmp.eq.s32.totalorder %s34, 0
      %p145 = por %p143, %p144
      %s147 = sadd.s32 %s146, 1
      %p150 = scmp.eq.s32.totalorder %s28, 5
      %p151 = scmp.ne.s32.totalorder %s146, %s148
      %p152 = scmp.eq.s32.totalorder %s28, 0
      %p153 = por %p151, %p152
      %p154 = scmp.ne.s32.totalorder %s146, %s148
      %p155 = scmp.eq.s32.totalorder %s33, 5
      %p156 = por %p154, %p155
      %p157 = scmp.ne.s32.totalorder %s148, %s149
      %p158 = scmp.eq.s32.totalorder %s33, 0
      %p159 = por %p157, %p158
      %p160 = scmp.ne.s32.totalorder %s148, %s149
      %p161 = scmp.eq.s32.totalorder %s34, 5
      %p162 = por %p160, %p161
      %p164 = scmp.ne.s32.totalorder %s149, %s163
      %p165 = scmp.eq.s32.totalorder %s34, 0
      %p166 = por %p164, %p165
      %s168 = sadd.s32 %s167, 1
      %p171 = scmp.eq.s32.totalorder %s28, 5
      %p172 = scmp.ne.s32.totalorder %s167, %s169
      %p173 = scmp.eq.s32.totalorder %s28, 0
      %p174 = por %p172, %p173
      %p175 = scmp.ne.s32.totalorder %s167, %s169
      %p176 = scmp.eq.s32.totalorder %s33, 5
      %p177 = por %p175, %p176
      %p178 = scmp.ne.s32.totalorder %s169, %s170
      %p179 = scmp.eq.s32.totalorder %s33, 0
      %p180 = por %p178, %p179
      %p181 = scmp.ne.s32.totalorder %s169, %s170
      %p182 = scmp.eq.s32.totalorder %s34, 5
      %p183 = por %p181, %p182
      %p185 = scmp.ne.s32.totalorder %s170, %s184
      %p186 = scmp.eq.s32.totalorder %s34, 0
      %p187 = por %p185, %p186
      %s189 = sadd.s32 %s188, 1
      %p192 = scmp.eq.s32.totalorder %s28, 5
      %p193 = scmp.ne.s32.totalorder %s188, %s190
      %p194 = scmp.eq.s32.totalorder %s28, 0
      %p195 = por %p193, %p194
      %p196 = scmp.ne.s32.totalorder %s188, %s190
      %p197 = scmp.eq.s32.totalorder %s33, 5
      %p198 = por %p196, %p197
      %p199 = scmp.ne.s32.totalorder %s190, %s191
      %p200 = scmp.eq.s32.totalorder %s33, 0
      %p201 = por %p199, %p200
      %p202 = scmp.ne.s32.totalorder %s190, %s191
      %p203 = scmp.eq.s32.totalorder %s34, 5
      %p204 = por %p202, %p203
      %p206 = scmp.ne.s32.totalorder %s191, %s205
      %p207 = scmp.eq.s32.totalorder %s34, 0
      %p208 = por %p206, %p207
      %s210 = sadd.s32 %s209, 1
      %p213 = scmp.eq.s32.totalorder %s28, 5
      %p214 = scmp.ne.s32.totalorder %s209, %s211
      %p215 = scmp.eq.s32.totalorder %s28, 0
      %p216 = por %p214, %p215
      %p217 = scmp.ne.s32.totalorder %s209, %s211
      %p218 = scmp.eq.s32.totalorder %s33, 5
      %p219 = por %p217, %p218
      %p220 = scmp.ne.s32.totalorder %s211, %s212
      %p221 = scmp.eq.s32.totalorder %s33, 0
      %p222 = por %p220, %p221
      %p223 = scmp.ne.s32.totalorder %s211, %s212
      %p224 = scmp.eq.s32.totalorder %s34, 5
      %p225 = por %p223, %p224
      %p227 = scmp.ne.s32.totalorder %s212, %s226
      %p228 = scmp.eq.s32.totalorder %s34, 0
      %p229 = por %p227, %p228
      %s231 = sadd.s32 %s230, 1
      %p234 = scmp.eq.s32.totalorder %s28, 5
      %p235 = scmp.ne.s32.totalorder %s230, %s232
      %p236 = scmp.eq.s32.totalorder %s28, 0
      %p237 = por %p235, %p236
      %p238 = scmp.ne.s32.totalorder %s230, %s232
      %p239 = scmp.eq.s32.totalorder %s33, 5
      %p240 = por %p238, %p239
      %p241 = scmp.ne.s32.totalorder %s232, %s233
      %p242 = scmp.eq.s32.totalorder %s33, 0
      %p243 = por %p241, %p242
      %p244 = scmp.ne.s32.totalorder %s232, %s233
      %p245 = scmp.eq.s32.totalorder %s34, 5
      %p246 = por %p244, %p245
      %p248 = scmp.ne.s32.totalorder %s233, %s247
      %p249 = scmp.eq.s32.totalorder %s34, 0
      %p250 = por %p248, %p249
      %s252 = sadd.s32 %s251, 1
      %p255 = scmp.eq.s32.totalorder %s28, 5
      %p256 = scmp.ne.s32.totalorder %s251, %s253
      %p257 = scmp.eq.s32.totalorder %s28, 0
      %p258 = por %p256, %p257
      %p259 = scmp.ne.s32.totalorder %s251, %s253
      %p260 = scmp.eq.s32.totalorder %s33, 5
      %p261 = por %p259, %p260
      %p262 = scmp.ne.s32.totalorder %s253, %s254
      %p263 = scmp.eq.s32.totalorder %s33, 0
      %p264 = por %p262, %p263
      %p265 = scmp.ne.s32.totalorder %s253, %s254
      %p266 = scmp.eq.s32.totalorder %s34, 5
      %p267 = por %p265, %p266
      %p269 = scmp.ne.s32.totalorder %s254, %s268
      %p270 = scmp.eq.s32.totalorder %s34, 0
      %p271 = por %p269, %p270
      %s273 = sadd.s32 %s272, 1
      %p276 = scmp.eq.s32.totalorder %s28, 5
      %p277 = scmp.ne.s32.totalorder %s272, %s274
      %p278 = scmp.eq.s32.totalorder %s28, 0
      %p279 = por %p277, %p278
      %p280 = scmp.ne.s32.totalorder %s272, %s274
      %p281 = scmp.eq.s32.totalorder %s33, 5
      %p282 = por %p280, %p281
      %p283 = scmp.ne.s32.totalorder %s274, %s275
      %p284 = scmp.eq.s32.totalorder %s33, 0
      %p285 = por %p283, %p284
      %p286 = scmp.ne.s32.totalorder %s274, %s275
      %p287 = scmp.eq.s32.totalorder %s34, 5
      %p288 = por %p286, %p287
      %p290 = scmp.ne.s32.totalorder %s275, %s289
      %p291 = scmp.eq.s32.totalorder %s34, 0
      %p292 = por %p290, %p291
      %s294 = sadd.s32 %s293, 1
      %p297 = scmp.eq.s32.totalorder %s28, 5
      %p298 = scmp.ne.s32.totalorder %s293, %s295
      %p299 = scmp.eq.s32.totalorder %s28, 0
      %p300 = por %p298, %p299
      %p301 = scmp.ne.s32.totalorder %s293, %s295
      %p302 = scmp.eq.s32.totalorder %s33, 5
      %p303 = por %p301, %p302
      %p304 = scmp.ne.s32.totalorder %s295, %s296
      %p305 = scmp.eq.s32.totalorder %s33, 0
      %p306 = por %p304, %p305
      %p307 = scmp.ne.s32.totalorder %s295, %s296
      %p308 = scmp.eq.s32.totalorder %s34, 5
      %p309 = por %p307, %p308
      %p311 = scmp.ne.s32.totalorder %s296, %s310
      %p312 = scmp.eq.s32.totalorder %s34, 0
      %p313 = por %p311, %p312
      %s315 = sadd.s32 %s314, 1
      %p318 = scmp.eq.s32.totalorder %s28, 5
      %p319 = scmp.ne.s32.totalorder %s314, %s316
      %p320 = scmp.eq.s32.totalorder %s28, 0
      %p321 = por %p319, %p320
      %p322 = scmp.ne.s32.totalorder %s314, %s316
      %p323 = scmp.eq.s32.totalorder %s33, 5
      %p324 = por %p322, %p323
      %p325 = scmp.ne.s32.totalorder %s316, %s317
      %p326 = scmp.eq.s32.totalorder %s33, 0
      %p327 = por %p325, %p326
      %p328 = scmp.ne.s32.totalorder %s316, %s317
      %p329 = scmp.eq.s32.totalorder %s34, 5
      %p330 = por %p328, %p329
      %p332 = scmp.ne.s32.totalorder %s317, %s331
      %p333 = scmp.eq.s32.totalorder %s34, 0
      %p334 = por %p332, %p333
      %s336 = sadd.s32 %s335, 1
      %p339 = scmp.eq.s32.totalorder %s28, 5
      %p340 = scmp.ne.s32.totalorder %s335, %s337
      %p341 = scmp.eq.s32.totalorder %s28, 0
      %p342 = por %p340, %p341
      %p343 = scmp.ne.s32.totalorder %s335, %s337
      %p344 = scmp.eq.s32.totalorder %s33, 5
      %p345 = por %p343, %p344
      %p346 = scmp.ne.s32.totalorder %s337, %s338
      %p347 = scmp.eq.s32.totalorder %s33, 0
      %p348 = por %p346, %p347
      %p349 = scmp.ne.s32.totalorder %s337, %s338
      %p350 = scmp.eq.s32.totalorder %s34, 5
      %p351 = por %p349, %p350
      %p353 = scmp.ne.s32.totalorder %s338, %s352
      %p354 = scmp.eq.s32.totalorder %s34, 0
      %p355 = por %p353, %p354
      %s356 = ssub.s32 %s28, %s35
      %p357 = scmp.eq.s32.totalorder %s356, 0
      %s359 = sadd.s32 %s358, 1
      %s360 = scalar_select %p357, %s358, %s359
      %p363 = pneg %p357
      %p364 = scmp.eq.s32.totalorder %s28, 5
      %p365 = por %p363, %p364
      %p366 = scmp.ne.s32.totalorder %s358, %s361
      %p367 = scmp.eq.s32.totalorder %s28, 0
      %p368 = por %p366, %p367
      %p369 = scmp.ne.s32.totalorder %s358, %s361
      %p370 = scmp.eq.s32.totalorder %s33, 5
      %p371 = por %p369, %p370
      %p372 = scmp.ne.s32.totalorder %s361, %s362
      %p373 = scmp.eq.s32.totalorder %s33, 0
      %p374 = por %p372, %p373
      %p375 = scmp.ne.s32.totalorder %s361, %s362
      %p376 = scmp.eq.s32.totalorder %s34, 5
      %p377 = por %p375, %p376
      %p379 = scmp.ne.s32.totalorder %s362, %s378
      %p380 = scmp.eq.s32.totalorder %s34, 0
      %p381 = por %p379, %p380
      %s383 = sadd.s32 %s382, 1
      %p386 = scmp.eq.s32.totalorder %s28, 5
      %p387 = scmp.ne.s32.totalorder %s382, %s384
      %p388 = scmp.eq.s32.totalorder %s28, 0
      %p389 = por %p387, %p388
      %p390 = scmp.ne.s32.totalorder %s382, %s384
      %p391 = scmp.eq.s32.totalorder %s33, 5
      %p392 = por %p390, %p391
      %p393 = scmp.ne.s32.totalorder %s384, %s385
      %p394 = scmp.eq.s32.totalorder %s33, 0
      %p395 = por %p393, %p394
      %p396 = scmp.ne.s32.totalorder %s384, %s385
      %p397 = scmp.eq.s32.totalorder %s34, 5
      %p398 = por %p396, %p397
      %p400 = scmp.ne.s32.totalorder %s385, %s399
      %p401 = scmp.eq.s32.totalorder %s34, 0
      %p402 = por %p400, %p401
      %s404 = sadd.s32 %s403, 1
      %p407 = scmp.eq.s32.totalorder %s28, 5
      %p408 = scmp.ne.s32.totalorder %s403, %s405
      %p409 = scmp.eq.s32.totalorder %s28, 0
      %p410 = por %p408, %p409
      %p411 = scmp.ne.s32.totalorder %s403, %s405
      %p412 = scmp.eq.s32.totalorder %s33, 5
      %p413 = por %p411, %p412
      %p414 = scmp.ne.s32.totalorder %s405, %s406
      %p415 = scmp.eq.s32.totalorder %s33, 0
      %p416 = por %p414, %p415
      %p417 = scmp.ne.s32.totalorder %s405, %s406
      %p418 = scmp.eq.s32.totalorder %s34, 5
      %p419 = por %p417, %p418
      %p421 = scmp.ne.s32.totalorder %s406, %s420
      %p422 = scmp.eq.s32.totalorder %s34, 0
      %p423 = por %p421, %p422
      %p424 = scmp.le.s32.totalorder 1, %s28
      %p425 = scmp.lt.s32.totalorder %s28, 7
      %p426 = pnand %p424, %p425
      %p427 = pneg %p426
      // Predicated region
      $region9: #{tpu_custom_call.1} parent=5 // pred_check
        _
      $region10: #{tpu_custom_call.1} parent=5 // pred_check_branch
        %429 = sbr.rel (%p426) target = $region12
      $region11: #{tpu_custom_call.1} parent=5 // pred_region
        %s430 = ssub.s32 %s28, 1
        // Predicated region
        $region13: #{tpu_custom_call.1} parent=11 // pred_check
          %p431 = pneg %p75
        $region14: #{tpu_custom_call.1} parent=11 // pred_check_branch
          %433 = sbr.rel (%p431) target = $region16
        $region15: #{tpu_custom_call.1} parent=11 // pred_region
          _
        $region16: #{tpu_custom_call.1} parent=11 // pred_fallthru
          _
        // Predicated region
        $region17: #{tpu_custom_call.1} parent=11 // pred_check
          %p434 = pneg %p96
        $region18: #{tpu_custom_call.1} parent=11 // pred_check_branch
          %436 = sbr.rel (%p434) target = $region20
        $region19: #{tpu_custom_call.1} parent=11 // pred_region
          _
        $region20: #{tpu_custom_call.1} parent=11 // pred_fallthru
          _
        // Predicated region
        $region21: #{tpu_custom_call.1} parent=11 // pred_check
          %p437 = pneg %p117
        $region22: #{tpu_custom_call.1} parent=11 // pred_check_branch
          %439 = sbr.rel (%p437) target = $region24
        $region23: #{tpu_custom_call.1} parent=11 // pred_region
          _
        $region24: #{tpu_custom_call.1} parent=11 // pred_fallthru
          _
        // Predicated region
        $region25: #{tpu_custom_call.1} parent=11 // pred_check
          %p440 = pneg %p138
        $region26: #{tpu_custom_call.1} parent=11 // pred_check_branch
          %442 = sbr.rel (%p440) target = $region28
        $region27: #{tpu_custom_call.1} parent=11 // pred_region
          _
        $region28: #{tpu_custom_call.1} parent=11 // pred_fallthru
          _
        // Predicated region
        $region29: #{tpu_custom_call.1} parent=11 // pred_check
          %p443 = pneg %p159
        $region30: #{tpu_custom_call.1} parent=11 // pred_check_branch
          %445 = sbr.rel (%p443) target = $region32
        $region31: #{tpu_custom_call.1} parent=11 // pred_region
          _
        $region32: #{tpu_custom_call.1} parent=11 // pred_fallthru
          _
        // Predicated region
        $region33: #{tpu_custom_call.1} parent=11 // pred_check
          %p446 = pneg %p180
        $region34: #{tpu_custom_call.1} parent=11 // pred_check_branch
          %448 = sbr.rel (%p446) target = $region36
        $region35: #{tpu_custom_call.1} parent=11 // pred_region
          _
        $region36: #{tpu_custom_call.1} parent=11 // pred_fallthru
          _
        // Predicated region
        $region37: #{tpu_custom_call.1} parent=11 // pred_check
          %p449 = pneg %p201
        $region38: #{tpu_custom_call.1} parent=11 // pred_check_branch
          %451 = sbr.rel (%p449) target = $region40
        $region39: #{tpu_custom_call.1} parent=11 // pred_region
          _
        $region40: #{tpu_custom_call.1} parent=11 // pred_fallthru
          _
        // Predicated region
        $region41: #{tpu_custom_call.1} parent=11 // pred_check
          %p452 = pneg %p222
        $region42: #{tpu_custom_call.1} parent=11 // pred_check_branch
          %454 = sbr.rel (%p452) target = $region44
        $region43: #{tpu_custom_call.1} parent=11 // pred_region
          _
        $region44: #{tpu_custom_call.1} parent=11 // pred_fallthru
          _
        // Predicated region
        $region45: #{tpu_custom_call.1} parent=11 // pred_check
          %p455 = pneg %p243
        $region46: #{tpu_custom_call.1} parent=11 // pred_check_branch
          %457 = sbr.rel (%p455) target = $region48
        $region47: #{tpu_custom_call.1} parent=11 // pred_region
          _
        $region48: #{tpu_custom_call.1} parent=11 // pred_fallthru
          _
        // Predicated region
        $region49: #{tpu_custom_call.1} parent=11 // pred_check
          %p458 = pneg %p264
        $region50: #{tpu_custom_call.1} parent=11 // pred_check_branch
          %460 = sbr.rel (%p458) target = $region52
        $region51: #{tpu_custom_call.1} parent=11 // pred_region
          _
        $region52: #{tpu_custom_call.1} parent=11 // pred_fallthru
          _
        // Predicated region
        $region53: #{tpu_custom_call.1} parent=11 // pred_check
          %p461 = pneg %p285
        $region54: #{tpu_custom_call.1} parent=11 // pred_check_branch
          %463 = sbr.rel (%p461) target = $region56
        $region55: #{tpu_custom_call.1} parent=11 // pred_region
          _
        $region56: #{tpu_custom_call.1} parent=11 // pred_fallthru
          _
        // Predicated region
        $region57: #{tpu_custom_call.1} parent=11 // pred_check
          %p464 = pneg %p306
        $region58: #{tpu_custom_call.1} parent=11 // pred_check_branch
          %466 = sbr.rel (%p464) target = $region60
        $region59: #{tpu_custom_call.1} parent=11 // pred_region
          _
        $region60: #{tpu_custom_call.1} parent=11 // pred_fallthru
          _
        // Predicated region
        $region61: #{tpu_custom_call.1} parent=11 // pred_check
          %p467 = pneg %p327
        $region62: #{tpu_custom_call.1} parent=11 // pred_check_branch
          %469 = sbr.rel (%p467) target = $region64
        $region63: #{tpu_custom_call.1} parent=11 // pred_region
          _
        $region64: #{tpu_custom_call.1} parent=11 // pred_fallthru
          _
        // Predicated region
        $region65: #{tpu_custom_call.1} parent=11 // pred_check
          %p470 = pneg %p348
        $region66: #{tpu_custom_call.1} parent=11 // pred_check_branch
          %472 = sbr.rel (%p470) target = $region68
        $region67: #{tpu_custom_call.1} parent=11 // pred_region
          _
        $region68: #{tpu_custom_call.1} parent=11 // pred_fallthru
          _
      $region12: #{tpu_custom_call.1} parent=5 // pred_fallthru
        _
      %p473 = scmp.lt.s32.totalorder %s28, 6
      // Predicated region
      $region69: #{tpu_custom_call.1} parent=5 // pred_check
        %p474 = pneg %p473
      $region70: #{tpu_custom_call.1} parent=5 // pred_check_branch
        %476 = sbr.rel (%p474) target = $region72
      $region71: #{tpu_custom_call.1} parent=5 // pred_region
        // Predicated region
        $region73: #{tpu_custom_call.1} parent=71 // pred_check
          %p477 = pneg %p48
        $region74: #{tpu_custom_call.1} parent=71 // pred_check_branch
          %479 = sbr.rel (%p477) target = $region76
        $region75: #{tpu_custom_call.1} parent=71 // pred_region
          %p480 = scmp.lt.s32.totalorder %s28, 5
          %s481 = scalar_select %p480, %s28, 5
          %s482 = smul.addr %s481, 8
          %s483 = scalar_lea.vmem %s0, %s482
        $region76: #{tpu_custom_call.1} parent=71 // pred_fallthru
          _
      $region72: #{tpu_custom_call.1} parent=5 // pred_fallthru
        _
      %p484 = scmp.le.s32.totalorder 1, %s28
      %p485 = scmp.lt.s32.totalorder %s28, 7
      %p486 = pnand %p484, %p485
      %p487 = pneg %p486
      // Predicated region
      $region77: #{tpu_custom_call.1} parent=5 // pred_check
        _
      $region78: #{tpu_custom_call.1} parent=5 // pred_check_branch
        %489 = sbr.rel (%p486) target = $region80
      $region79: #{tpu_custom_call.1} parent=5 // pred_region
        %s490 = ssub.s32 %s28, 1
        %p491 = scmp.lt.s32.totalorder %s33, 5
        %s492 = scalar_select %p491, %s33, 5
        %s493 = smul.addr %s492, 8
        %s494 = scalar_lea.vmem %s0, %s493
        %p495 = pneg %p54
        %p496 = pneg %p51
        %p497 = pneg %p75
        %p498 = pneg %p72
        %p499 = pneg %p96
        %p500 = pneg %p93
        %p501 = pneg %p117
        %p502 = pneg %p114
        %p503 = pneg %p138
        %p504 = pneg %p135
        %p505 = pneg %p159
        %p506 = pneg %p156
        %p507 = pneg %p180
        %p508 = pneg %p177
        %p509 = pneg %p201
        %p510 = pneg %p198
        %p511 = pneg %p222
        %p512 = pneg %p219
        %p513 = pneg %p243
        %p514 = pneg %p240
        %p515 = pneg %p264
        %p516 = pneg %p261
        %p517 = pneg %p285
        %p518 = pneg %p282
        %p519 = pneg %p306
        %p520 = pneg %p303
        %p521 = pneg %p327
        %p522 = pneg %p324
        %p523 = pneg %p348
        %p524 = pneg %p345
        %p525 = pneg %p374
        %p526 = pneg %p371
        %s527 = sand.u32 %s361, 1
        %s528 = scalar_lea.sflag [#allocation3], %s527
        %s529 = sand.u32 %s361, 1
        %s530 = smul.addr %s529, 8
        %s531 = scalar_lea.vmem [#allocation2], %s530
        %p532 = pneg %p395
        %p533 = pneg %p392
        %p534 = pneg %p416
        %p535 = pneg %p413
        %p536 = scmp.lt.s32.totalorder %s33, 5
        %s537 = scalar_select %p536, %s33, 5
        %s538 = smul.addr %s537, 8
        %s539 = scalar_lea.vmem %s0, %s538
        %p540 = scmp.eq.s32.totalorder %s33, 0
        // Predicated region
        $region81: #{tpu_custom_call.1} parent=79 // pred_check
          %p541 = pneg %p540
        $region82: #{tpu_custom_call.1} parent=79 // pred_check_branch
          %543 = sbr.rel (%p541) target = $region84
        $region83: #{tpu_custom_call.1} parent=79 // pred_region
          %v544 = vld [vmem:[%s2] sm:$0xff]
          %v545 = vld [vmem:[%s2 + $0x8] sm:$0xff]
          %vm546 = vcmask 261120
          %547 = vst.msk [vmem:[#allocation4] sm:$0xff] %vm546, %v544
          %548 = vst.msk [vmem:[#allocation4 + $0x8] sm:$0xff] %vm546, %v545
          %v549 = vld [vmem:[%s3] sm:$0xff]
          %vm550 = vcmask 523264
          %551 = vst.msk [vmem:[#allocation6] sm:$0xff] %vm550, %v549
        $region84: #{tpu_custom_call.1} parent=79 // pred_fallthru
          _
        %v552 = vld [vmem:[%s539] sm:$0xff]
        %v553 = vlaneseq
        %v554 = vand.u32 %v553, 127
        %555 = vset.pattern.permute.xlu0 0
        %556 = vperm.xlu0 %555, %v552
        %v557 = vpop.permute.xlu0 %556
        %vm558 = vcmp.eq.s32.totalorder %v554, %v557
        %v559 = vsel %vm558, 1, 0
        %v560 = vcvt.s32.f32 %v559
        %v561 = vld [vmem:[%s1] sm:$0xff]
        %v562 = vld [vmem:[%s1 + $0x8] sm:$0xff]
        %v563 = vld [vmem:[%s1 + $0x10] sm:$0xff]
        %v564 = vld [vmem:[%s1 + $0x18] sm:$0xff]
        %vm565 = vcmask 261120
        %v567 = vsel %vm565, %v560, 0
        %569 = vmatprep.subr.mxu0 0.0
        %570 = vmatpush1.msra.mxu0 %v561
        %571 = vmatprep.subr.mxu0 0.0
        %572 = vmatpush1.msra.mxu0 %v562
        %573 = vmatprep.subr.mxu0 0.0
        %574 = vmatpush1.msra.mxu0 %v563
        %575 = vmatprep.subr.mxu0 0.0
        %576 = vmatpush1.msra.mxu0 %v564
        %577 = vmatprep.subr.mxu0 0.0
        %578 = vmatpush1.msra.mxu0 0.0
        %579 = vmatprep.subr.mxu0 0.0
        %580 = vmatpush1.msra.mxu0 0.0
        %581 = vmatprep.subr.mxu0 0.0
        %582 = vmatpush1.msra.mxu0 0.0
        %583 = vmatprep.subr.mxu0 0.0
        %584 = vmatpush1.msra.mxu0 0.0
        %585 = vmatprep.subr.mxu0 0.0
        %586 = vmatpush1.msra.mxu0 0.0
        %587 = vmatprep.subr.mxu0 0.0
        %588 = vmatpush1.msra.mxu0 0.0
        %589 = vmatprep.subr.mxu0 0.0
        %590 = vmatpush1.msra.mxu0 0.0
        %591 = vmatprep.subr.mxu0 0.0
        %592 = vmatpush1.msra.mxu0 0.0
        %593 = vmatprep.subr.mxu0 0.0
        %594 = vmatpush1.msra.mxu0 0.0
        %595 = vmatprep.subr.mxu0 0.0
        %596 = vmatpush1.msra.mxu0 0.0
        %597 = vmatprep.subr.mxu0 0.0
        %598 = vmatpush1.msra.mxu0 0.0
        %599 = vmatprep.subr.mxu0 0.0
        %600 = vmatpush1.msra.mxu0 0.0
        %601 = vmatprep.subr.mxu0 0.0
        %602 = vmatpush1.msra.mxu0 0.0
        %603 = vmatprep.subr.mxu0 0.0
        %604 = vmatpush1.msra.mxu0 0.0
        %605 = vmatprep.subr.mxu0 0.0
        %606 = vmatpush1.msra.mxu0 0.0
        %607 = vmatprep.subr.mxu0 0.0
        %608 = vmatpush1.msra.mxu0 0.0
        %609 = vmatprep.subr.mxu0 0.0
        %610 = vmatpush1.msra.mxu0 0.0
        %611 = vmatprep.subr.mxu0 0.0
        %612 = vmatpush1.msra.mxu0 0.0
        %613 = vmatprep.subr.mxu0 0.0
        %614 = vmatpush1.msra.mxu0 0.0
        %615 = vmatprep.subr.mxu0 0.0
        %616 = vmatpush1.msra.mxu0 0.0
        %617 = vmatprep.subr.mxu0 0.0
        %618 = vmatpush1.msra.mxu0 0.0
        %619 = vmatprep.subr.mxu0 0.0
        %620 = vmatpush1.msra.mxu0 0.0
        %621 = vmatprep.subr.mxu0 0.0
        %622 = vmatpush1.msra.mxu0 0.0
        %623 = vmatprep.subr.mxu0 0.0
        %624 = vmatpush1.msra.mxu0 0.0
        %625 = vmatprep.subr.mxu0 0.0
        %626 = vmatpush1.msra.mxu0 0.0
        %627 = vmatprep.subr.mxu0 0.0
        %628 = vmatpush1.msra.mxu0 0.0
        %629 = vmatprep.subr.mxu0 0.0
        %630 = vmatpush1.msra.mxu0 0.0
        %631 = vmatprep.subr.mxu0 0.0
        %632 = vmatpush1.msra.mxu0 0.0
        %633 = vmatprep.mubr.f32.mxu0 0.0
        %634 = vmatmul.mubr.f32.gmra.mrb[0].mxu0 %v567
        %v635 = vpop.f32.mrb[0].mxu0
        %v636 = vadd.f32 0.0, %v635
        %v637 = vpop.f32.mrb[0].mxu0
        %638 = vdwg.mxu0
        %s639 = scalar_lea.vmem [#allocation4], 8
        %v640 = vld [vmem:[%s639] sm:$0xff]
        %v641 = vld [vmem:[#allocation6] sm:$0xff]
        %v642 = vld [vmem:[%s4] sm:$0xff]
        %v643 = vld [vmem:[%s4 + $0x8] sm:$0xff]
        %v644 = vld [vmem:[%s4 + $0x10] sm:$0xff]
        %v645 = vld [vmem:[%s4 + $0x18] sm:$0xff]
        %v646 = vld [vmem:[%s5] sm:$0x1]
        %v648 = vlaneseq
        %v649 = vshrl.u32 %v648, 7
        %v650 = vsub.s32 0, %v649
        %v651 = vrot.slane %v646, %v650
        %v654 = vsel %vm565, %v640, 0
        %656 = vmatprep.subr.mxu0 0.0
        %657 = vmatpush1.msra.mxu0 %v642
        %658 = vmatprep.subr.mxu0 0.0
        %659 = vmatpush1.msra.mxu0 %v643
        %660 = vmatprep.subr.mxu0 0.0
        %661 = vmatpush1.msra.mxu0 %v644
        %662 = vmatprep.subr.mxu0 0.0
        %663 = vmatpush1.msra.mxu0 %v645
        %664 = vmatprep.subr.mxu0 0.0
        %665 = vmatpush1.msra.mxu0 0.0
        %666 = vmatprep.subr.mxu0 0.0
        %667 = vmatpush1.msra.mxu0 0.0
        %668 = vmatprep.subr.mxu0 0.0
        %669 = vmatpush1.msra.mxu0 0.0
        %670 = vmatprep.subr.mxu0 0.0
        %671 = vmatpush1.msra.mxu0 0.0
        %672 = vmatprep.subr.mxu0 0.0
        %673 = vmatpush1.msra.mxu0 0.0
        %674 = vmatprep.subr.mxu0 0.0
        %675 = vmatpush1.msra.mxu0 0.0
        %676 = vmatprep.subr.mxu0 0.0
        %677 = vmatpush1.msra.mxu0 0.0
        %678 = vmatprep.subr.mxu0 0.0
        %679 = vmatpush1.msra.mxu0 0.0
        %680 = vmatprep.subr.mxu0 0.0
        %681 = vmatpush1.msra.mxu0 0.0
        %682 = vmatprep.subr.mxu0 0.0
        %683 = vmatpush1.msra.mxu0 0.0
        %684 = vmatprep.subr.mxu0 0.0
        %685 = vmatpush1.msra.mxu0 0.0
        %686 = vmatprep.subr.mxu0 0.0
        %687 = vmatpush1.msra.mxu0 0.0
        %688 = vmatprep.subr.mxu0 0.0
        %689 = vmatpush1.msra.mxu0 0.0
        %690 = vmatprep.subr.mxu0 0.0
        %691 = vmatpush1.msra.mxu0 0.0
        %692 = vmatprep.subr.mxu0 0.0
        %693 = vmatpush1.msra.mxu0 0.0
        %694 = vmatprep.subr.mxu0 0.0
        %695 = vmatpush1.msra.mxu0 0.0
        %696 = vmatprep.subr.mxu0 0.0
        %697 = vmatpush1.msra.mxu0 0.0
        %698 = vmatprep.subr.mxu0 0.0
        %699 = vmatpush1.msra.mxu0 0.0
        %700 = vmatprep.subr.mxu0 0.0
        %701 = vmatpush1.msra.mxu0 0.0
        %702 = vmatprep.subr.mxu0 0.0
        %703 = vmatpush1.msra.mxu0 0.0
        %704 = vmatprep.subr.mxu0 0.0
        %705 = vmatpush1.msra.mxu0 0.0
        %706 = vmatprep.subr.mxu0 0.0
        %707 = vmatpush1.msra.mxu0 0.0
        %708 = vmatprep.subr.mxu0 0.0
        %709 = vmatpush1.msra.mxu0 0.0
        %710 = vmatprep.subr.mxu0 0.0
        %711 = vmatpush1.msra.mxu0 0.0
        %712 = vmatprep.subr.mxu0 0.0
        %713 = vmatpush1.msra.mxu0 0.0
        %714 = vmatprep.subr.mxu0 0.0
        %715 = vmatpush1.msra.mxu0 0.0
        %716 = vmatprep.subr.mxu0 0.0
        %717 = vmatpush1.msra.mxu0 0.0
        %718 = vmatprep.subr.mxu0 0.0
        %719 = vmatpush1.msra.mxu0 0.0
        %720 = vmatprep.mubr.f32.mxu0 0.0
        %721 = vmatmul.mubr.f32.gmra.mrb[0].mxu0 %v654
        %v722 = vpop.f32.mrb[0].mxu0
        %v723 = vadd.f32 %v651, %v722
        %v724 = vpop.f32.mrb[0].mxu0
        %725 = vdwg.mxu0
        %vm726 = vcmask 23552
        %v727 = vsel %vm726, %v723, -inf
        %728 = vmax.xlane.f32.xlu0 %v727
        %v729 = vpop.xlane.xlu0 %728
        %v730 = vsub.f32 %v723, %v729
        %v731 = vmul.f32 %v730, 1.442695
        %v732 = vpow.pop %v731
        %v733 = vsel %vm726, %v732, 0.0
        %734 = vadd.xlane.f32.xlu0 %v733
        %v735 = vpop.xlane.xlu0 %734
        %v736 = vrcp.pop %v735
        %v737 = vmul.f32 %v732, %v736
        %v738 = vtanh.pop %v723
        %740 = vrot.lane.b32.xlu0 %v641, 120
        %v741 = vpop.permute.xlu0 %740
        %vm743 = vcmask 457728
        %v744 = vsel %vm743, %v741, 0.0
        %746 = vrot.lane.b32.xlu0 %v738, 125
        %v747 = vpop.permute.xlu0 %746
        %749 = vrot.lane.b32.xlu0 %v641, 8
        %v750 = vpop.permute.xlu0 %749
        %vm752 = vcmask 64512
        %v753 = vsel %vm752, %v747, %v750
        %755 = vset.pattern.permute.xlu0 2
        %756 = vperm.xlu0 %755, %v737
        %v757 = vpop.permute.xlu0 %756
        %v759 = vmul.f32 %v757, %v641
        %760 = vset.pattern.permute.xlu0 0
        %761 = vperm.xlu0 %760, %v737
        %v762 = vpop.permute.xlu0 %761
        %v764 = vmul.f32 %v762, %v753
        %v765 = vadd.f32 %v759, %v764
        %766 = vset.pattern.permute.xlu0 1
        %767 = vperm.xlu0 %766, %v737
        %v768 = vpop.permute.xlu0 %767
        %v770 = vmul.f32 %v768, %v744
        %v771 = vadd.f32 %v765, %v770
        %vm772 = vcmask 523264
        %773 = vst.msk [vmem:[#allocation6] sm:$0xff] %vm772, %v771
        %v774 = vld [vmem:[#allocation4] sm:$0xff]
        %v775 = vld [vmem:[%s6] sm:$0xff]
        %v776 = vld [vmem:[%s6 + $0x8] sm:$0xff]
        %v777 = vld [vmem:[%s7] sm:$0xff]
        %v779 = vsel %vm752, %v771, 0
        %781 = vmatprep.subr.mxu0 0.0
        %782 = vmatpush1.msra.mxu0 %v777
        %783 = vmatprep.subr.mxu0 0.0
        %784 = vmatpush1.msra.mxu0 0.0
        %785 = vmatprep.subr.mxu0 0.0
        %786 = vmatpush1.msra.mxu0 0.0
        %787 = vmatprep.subr.mxu0 0.0
        %788 = vmatpush1.msra.mxu0 0.0
        %789 = vmatprep.subr.mxu0 0.0
        %790 = vmatpush1.msra.mxu0 0.0
        %791 = vmatprep.subr.mxu0 0.0
        %792 = vmatpush1.msra.mxu0 0.0
        %793 = vmatprep.subr.mxu0 0.0
        %794 = vmatpush1.msra.mxu0 0.0
        %795 = vmatprep.subr.mxu0 0.0
        %796 = vmatpush1.msra.mxu0 0.0
        %797 = vmatprep.subr.mxu0 0.0
        %798 = vmatpush1.msra.mxu0 0.0
        %799 = vmatprep.subr.mxu0 0.0
        %800 = vmatpush1.msra.mxu0 0.0
        %801 = vmatprep.subr.mxu0 0.0
        %802 = vmatpush1.msra.mxu0 0.0
        %803 = vmatprep.subr.mxu0 0.0
        %804 = vmatpush1.msra.mxu0 0.0
        %805 = vmatprep.subr.mxu0 0.0
        %806 = vmatpush1.msra.mxu0 0.0
        %807 = vmatprep.subr.mxu0 0.0
        %808 = vmatpush1.msra.mxu0 0.0
        %809 = vmatprep.subr.mxu0 0.0
        %810 = vmatpush1.msra.mxu0 0.0
        %811 = vmatprep.subr.mxu0 0.0
        %812 = vmatpush1.msra.mxu0 0.0
        %813 = vmatprep.subr.mxu0 0.0
        %814 = vmatpush1.msra.mxu0 0.0
        %815 = vmatprep.subr.mxu0 0.0
        %816 = vmatpush1.msra.mxu0 0.0
        %817 = vmatprep.subr.mxu0 0.0
        %818 = vmatpush1.msra.mxu0 0.0
        %819 = vmatprep.subr.mxu0 0.0
        %820 = vmatpush1.msra.mxu0 0.0
        %821 = vmatprep.subr.mxu0 0.0
        %822 = vmatpush1.msra.mxu0 0.0
        %823 = vmatprep.subr.mxu0 0.0
        %824 = vmatpush1.msra.mxu0 0.0
        %825 = vmatprep.subr.mxu0 0.0
        %826 = vmatpush1.msra.mxu0 0.0
        %827 = vmatprep.subr.mxu0 0.0
        %828 = vmatpush1.msra.mxu0 0.0
        %829 = vmatprep.subr.mxu0 0.0
        %830 = vmatpush1.msra.mxu0 0.0
        %831 = vmatprep.subr.mxu0 0.0
        %832 = vmatpush1.msra.mxu0 0.0
        %833 = vmatprep.subr.mxu0 0.0
        %834 = vmatpush1.msra.mxu0 0.0
        %835 = vmatprep.subr.mxu0 0.0
        %836 = vmatpush1.msra.mxu0 0.0
        %837 = vmatprep.subr.mxu0 0.0
        %838 = vmatpush1.msra.mxu0 0.0
        %839 = vmatprep.subr.mxu0 0.0
        %840 = vmatpush1.msra.mxu0 0.0
        %841 = vmatprep.subr.mxu0 0.0
        %842 = vmatpush1.msra.mxu0 0.0
        %843 = vmatprep.subr.mxu0 0.0
        %844 = vmatpush1.msra.mxu0 0.0
        %845 = vmatprep.mubr.f32.mxu0 0.0
        %846 = vmatmul.mubr.f32.gmra.mrb[0].mxu0 %v779
        %v847 = vpop.f32.mrb[0].mxu0
        %v848 = vadd.f32 0.0, %v847
        %v849 = vpop.f32.mrb[0].mxu0
        %850 = vdwg.mxu0
        %vm851 = vcmask 130048
        %v853 = vsel %vm851, %v636, 0
        %855 = vmatprep.subr.mxu0 0.0
        %856 = vmatpush1.msra.mxu0 %v775
        %857 = vmatprep.subr.mxu0 0.0
        %858 = vmatpush1.msra.mxu0 %v776
        %859 = vmatprep.subr.mxu0 0.0
        %860 = vmatpush1.msra.mxu0 0.0
        %861 = vmatprep.subr.mxu0 0.0
        %862 = vmatpush1.msra.mxu0 0.0
        %863 = vmatprep.subr.mxu0 0.0
        %864 = vmatpush1.msra.mxu0 0.0
        %865 = vmatprep.subr.mxu0 0.0
        %866 = vmatpush1.msra.mxu0 0.0
        %867 = vmatprep.subr.mxu0 0.0
        %868 = vmatpush1.msra.mxu0 0.0
        %869 = vmatprep.subr.mxu0 0.0
        %870 = vmatpush1.msra.mxu0 0.0
        %871 = vmatprep.subr.mxu0 0.0
        %872 = vmatpush1.msra.mxu0 0.0
        %873 = vmatprep.subr.mxu0 0.0
        %874 = vmatpush1.msra.mxu0 0.0
        %875 = vmatprep.subr.mxu0 0.0
        %876 = vmatpush1.msra.mxu0 0.0
        %877 = vmatprep.subr.mxu0 0.0
        %878 = vmatpush1.msra.mxu0 0.0
        %879 = vmatprep.subr.mxu0 0.0
        %880 = vmatpush1.msra.mxu0 0.0
        %881 = vmatprep.subr.mxu0 0.0
        %882 = vmatpush1.msra.mxu0 0.0
        %883 = vmatprep.subr.mxu0 0.0
        %884 = vmatpush1.msra.mxu0 0.0
        %885 = vmatprep.subr.mxu0 0.0
        %886 = vmatpush1.msra.mxu0 0.0
        %887 = vmatprep.subr.mxu0 0.0
        %888 = vmatpush1.msra.mxu0 0.0
        %889 = vmatprep.subr.mxu0 0.0
        %890 = vmatpush1.msra.mxu0 0.0
        %891 = vmatprep.subr.mxu0 0.0
        %892 = vmatpush1.msra.mxu0 0.0
        %893 = vmatprep.subr.mxu0 0.0
        %894 = vmatpush1.msra.mxu0 0.0
        %895 = vmatprep.subr.mxu0 0.0
        %896 = vmatpush1.msra.mxu0 0.0
        %897 = vmatprep.subr.mxu0 0.0
        %898 = vmatpush1.msra.mxu0 0.0
        %899 = vmatprep.subr.mxu0 0.0
        %900 = vmatpush1.msra.mxu0 0.0
        %901 = vmatprep.subr.mxu0 0.0
        %902 = vmatpush1.msra.mxu0 0.0
        %903 = vmatprep.subr.mxu0 0.0
        %904 = vmatpush1.msra.mxu0 0.0
        %905 = vmatprep.subr.mxu0 0.0
        %906 = vmatpush1.msra.mxu0 0.0
        %907 = vmatprep.subr.mxu0 0.0
        %908 = vmatpush1.msra.mxu0 0.0
        %909 = vmatprep.subr.mxu0 0.0
        %910 = vmatpush1.msra.mxu0 0.0
        %911 = vmatprep.subr.mxu0 0.0
        %912 = vmatpush1.msra.mxu0 0.0
        %913 = vmatprep.subr.mxu0 0.0
        %914 = vmatpush1.msra.mxu0 0.0
        %915 = vmatprep.subr.mxu0 0.0
        %916 = vmatpush1.msra.mxu0 0.0
        %917 = vmatprep.subr.mxu0 0.0
        %918 = vmatpush1.msra.mxu0 0.0
        %919 = vmatprep.mubr.f32.mxu0 0.0
        %920 = vmatmul.mubr.f32.gmra.mrb[0].mxu0 %v853
        %v921 = vpop.f32.mrb[0].mxu0
        %v922 = vadd.f32 %v848, %v921
        %v923 = vpop.f32.mrb[0].mxu0
        %924 = vdwg.mxu0
        %v925 = vld [vmem:[%s9] sm:$0x1]
        %v927 = vlaneseq
        %v928 = vshrl.u32 %v927, 7
        %v929 = vsub.s32 0, %v928
        %v930 = vrot.slane %v925, %v929
        %v932 = vadd.f32 %v922, %v930
        %v933 = vld [vmem:[%s8] sm:$0xff]
        %v934 = vld [vmem:[%s8 + $0x8] sm:$0xff]
        %v935 = vld [vmem:[%s8 + $0x10] sm:$0xff]
        %v936 = vld [vmem:[%s8 + $0x18] sm:$0xff]
        %v937 = vld [vmem:[%s10] sm:$0x1]
        %v939 = vlaneseq
        %v940 = vshrl.u32 %v939, 7
        %v941 = vsub.s32 0, %v940
        %v942 = vrot.slane %v937, %v941
        %v945 = vsel %vm565, %v774, 0
        %947 = vmatprep.subr.mxu0 0.0
        %948 = vmatpush1.msra.mxu0 %v933
        %949 = vmatprep.subr.mxu0 0.0
        %950 = vmatpush1.msra.mxu0 %v934
        %951 = vmatprep.subr.mxu0 0.0
        %952 = vmatpush1.msra.mxu0 %v935
        %953 = vmatprep.subr.mxu0 0.0
        %954 = vmatpush1.msra.mxu0 %v936
        %955 = vmatprep.subr.mxu0 0.0
        %956 = vmatpush1.msra.mxu0 0.0
        %957 = vmatprep.subr.mxu0 0.0
        %958 = vmatpush1.msra.mxu0 0.0
        %959 = vmatprep.subr.mxu0 0.0
        %960 = vmatpush1.msra.mxu0 0.0
        %961 = vmatprep.subr.mxu0 0.0
        %962 = vmatpush1.msra.mxu0 0.0
        %963 = vmatprep.subr.mxu0 0.0
        %964 = vmatpush1.msra.mxu0 0.0
        %965 = vmatprep.subr.mxu0 0.0
        %966 = vmatpush1.msra.mxu0 0.0
        %967 = vmatprep.subr.mxu0 0.0
        %968 = vmatpush1.msra.mxu0 0.0
        %969 = vmatprep.subr.mxu0 0.0
        %970 = vmatpush1.msra.mxu0 0.0
        %971 = vmatprep.subr.mxu0 0.0
        %972 = vmatpush1.msra.mxu0 0.0
        %973 = vmatprep.subr.mxu0 0.0
        %974 = vmatpush1.msra.mxu0 0.0
        %975 = vmatprep.subr.mxu0 0.0
        %976 = vmatpush1.msra.mxu0 0.0
        %977 = vmatprep.subr.mxu0 0.0
        %978 = vmatpush1.msra.mxu0 0.0
        %979 = vmatprep.subr.mxu0 0.0
        %980 = vmatpush1.msra.mxu0 0.0
        %981 = vmatprep.subr.mxu0 0.0
        %982 = vmatpush1.msra.mxu0 0.0
        %983 = vmatprep.subr.mxu0 0.0
        %984 = vmatpush1.msra.mxu0 0.0
        %985 = vmatprep.subr.mxu0 0.0
        %986 = vmatpush1.msra.mxu0 0.0
        %987 = vmatprep.subr.mxu0 0.0
        %988 = vmatpush1.msra.mxu0 0.0
        %989 = vmatprep.subr.mxu0 0.0
        %990 = vmatpush1.msra.mxu0 0.0
        %991 = vmatprep.subr.mxu0 0.0
        %992 = vmatpush1.msra.mxu0 0.0
        %993 = vmatprep.subr.mxu0 0.0
        %994 = vmatpush1.msra.mxu0 0.0
        %995 = vmatprep.subr.mxu0 0.0
        %996 = vmatpush1.msra.mxu0 0.0
        %997 = vmatprep.subr.mxu0 0.0
        %998 = vmatpush1.msra.mxu0 0.0
        %999 = vmatprep.subr.mxu0 0.0
        %1000 = vmatpush1.msra.mxu0 0.0
        %1001 = vmatprep.subr.mxu0 0.0
        %1002 = vmatpush1.msra.mxu0 0.0
        %1003 = vmatprep.subr.mxu0 0.0
        %1004 = vmatpush1.msra.mxu0 0.0
        %1005 = vmatprep.subr.mxu0 0.0
        %1006 = vmatpush1.msra.mxu0 0.0
        %1007 = vmatprep.subr.mxu0 0.0
        %1008 = vmatpush1.msra.mxu0 0.0
        %1009 = vmatprep.subr.mxu0 0.0
        %1010 = vmatpush1.msra.mxu0 0.0
        %1011 = vmatprep.mubr.f32.mxu0 0.0
        %1012 = vmatmul.mubr.f32.gmra.mrb[0].mxu0 %v945
        %v1013 = vpop.f32.mrb[0].mxu0
        %v1014 = vadd.f32 %v942, %v1013
        %v1015 = vpop.f32.mrb[0].mxu0
        %1016 = vdwg.mxu0
        %v1017 = vadd.f32 %v932, %v1014
        %v1018 = vxor.u32 %v1017, 2147483648
        %v1019 = vmul.f32 %v1018, 1.442695
        %v1020 = vpow.pop %v1019
        %v1021 = vadd.f32 %v1020, 1.0
        %v1022 = vrcp.pop %v1021
        %v1023 = vmul.f32 1.0, %v1022
        %1025 = vrot.lane.b32.xlu0 %v1014, 64
        %v1026 = vpop.permute.xlu0 %1025
        %v1028 = vmul.f32 %v1023, %v1026
        %1030 = vrot.lane.b32.xlu0 %v1028, 64
        %v1031 = vpop.permute.xlu0 %1030
        %v1033 = vadd.f32 %v932, %v1031
        %v1034 = vtanh.pop %v1033
        %v1035 = vsub.f32 1.0, %v1023
        %1037 = vrot.lane.b32.xlu0 %v1034, 96
        %v1038 = vpop.permute.xlu0 %1037
        %v1040 = vmul.f32 %v1035, %v1038
        %1041 = vrot.lane.b32.xlu0 %v774, 32
        %v1042 = vpop.permute.xlu0 %1041
        %v1044 = vmul.f32 %v1023, %v1042
        %v1045 = vadd.f32 %v1040, %v1044
        %1047 = vrot.lane.b32.xlu0 %v1045, 96
        %v1048 = vpop.permute.xlu0 %1047
        %1050 = vst.msk [vmem:[#allocation4] sm:$0xff] %vm565, %v1048
        %v1051 = vld [vmem:[%s639] sm:$0xff]
        %v1052 = vld [vmem:[%s11] sm:$0xff]
        %v1053 = vld [vmem:[%s11 + $0x8] sm:$0xff]
        %v1054 = vld [vmem:[%s11 + $0x10] sm:$0xff]
        %v1055 = vld [vmem:[%s11 + $0x18] sm:$0xff]
        %v1056 = vld [vmem:[%s13] sm:$0x1]
        %v1058 = vlaneseq
        %v1059 = vshrl.u32 %v1058, 7
        %v1060 = vsub.s32 0, %v1059
        %v1061 = vrot.slane %v1056, %v1060
        %v1063 = vsel %vm565, %v1048, 0
        %1065 = vmatprep.subr.mxu0 0.0
        %1066 = vmatpush1.msra.mxu0 %v1052
        %1067 = vmatprep.subr.mxu0 0.0
        %1068 = vmatpush1.msra.mxu0 %v1053
        %1069 = vmatprep.subr.mxu0 0.0
        %1070 = vmatpush1.msra.mxu0 %v1054
        %1071 = vmatprep.subr.mxu0 0.0
        %1072 = vmatpush1.msra.mxu0 %v1055
        %1073 = vmatprep.subr.mxu0 0.0
        %1074 = vmatpush1.msra.mxu0 0.0
        %1075 = vmatprep.subr.mxu0 0.0
        %1076 = vmatpush1.msra.mxu0 0.0
        %1077 = vmatprep.subr.mxu0 0.0
        %1078 = vmatpush1.msra.mxu0 0.0
        %1079 = vmatprep.subr.mxu0 0.0
        %1080 = vmatpush1.msra.mxu0 0.0
        %1081 = vmatprep.subr.mxu0 0.0
        %1082 = vmatpush1.msra.mxu0 0.0
        %1083 = vmatprep.subr.mxu0 0.0
        %1084 = vmatpush1.msra.mxu0 0.0
        %1085 = vmatprep.subr.mxu0 0.0
        %1086 = vmatpush1.msra.mxu0 0.0
        %1087 = vmatprep.subr.mxu0 0.0
        %1088 = vmatpush1.msra.mxu0 0.0
        %1089 = vmatprep.subr.mxu0 0.0
        %1090 = vmatpush1.msra.mxu0 0.0
        %1091 = vmatprep.subr.mxu0 0.0
        %1092 = vmatpush1.msra.mxu0 0.0
        %1093 = vmatprep.subr.mxu0 0.0
        %1094 = vmatpush1.msra.mxu0 0.0
        %1095 = vmatprep.subr.mxu0 0.0
        %1096 = vmatpush1.msra.mxu0 0.0
        %1097 = vmatprep.subr.mxu0 0.0
        %1098 = vmatpush1.msra.mxu0 0.0
        %1099 = vmatprep.subr.mxu0 0.0
        %1100 = vmatpush1.msra.mxu0 0.0
        %1101 = vmatprep.subr.mxu0 0.0
        %1102 = vmatpush1.msra.mxu0 0.0
        %1103 = vmatprep.subr.mxu0 0.0
        %1104 = vmatpush1.msra.mxu0 0.0
        %1105 = vmatprep.subr.mxu0 0.0
        %1106 = vmatpush1.msra.mxu0 0.0
        %1107 = vmatprep.subr.mxu0 0.0
        %1108 = vmatpush1.msra.mxu0 0.0
        %1109 = vmatprep.subr.mxu0 0.0
        %1110 = vmatpush1.msra.mxu0 0.0
        %1111 = vmatprep.subr.mxu0 0.0
        %1112 = vmatpush1.msra.mxu0 0.0
        %1113 = vmatprep.subr.mxu0 0.0
        %1114 = vmatpush1.msra.mxu0 0.0
        %1115 = vmatprep.subr.mxu0 0.0
        %1116 = vmatpush1.msra.mxu0 0.0
        %1117 = vmatprep.subr.mxu0 0.0
        %1118 = vmatpush1.msra.mxu0 0.0
        %1119 = vmatprep.subr.mxu0 0.0
        %1120 = vmatpush1.msra.mxu0 0.0
        %1121 = vmatprep.subr.mxu0 0.0
        %1122 = vmatpush1.msra.mxu0 0.0
        %1123 = vmatprep.subr.mxu0 0.0
        %1124 = vmatpush1.msra.mxu0 0.0
        %1125 = vmatprep.subr.mxu0 0.0
        %1126 = vmatpush1.msra.mxu0 0.0
        %1127 = vmatprep.subr.mxu0 0.0
        %1128 = vmatpush1.msra.mxu0 0.0
        %1129 = vmatprep.mubr.f32.mxu0 0.0
        %1130 = vmatmul.mubr.f32.gmra.mrb[0].mxu0 %v1063
        %v1131 = vpop.f32.mrb[0].mxu0
        %v1132 = vadd.f32 %v1061, %v1131
        %v1133 = vpop.f32.mrb[0].mxu0
        %1134 = vdwg.mxu0
        %v1135 = vld [vmem:[%s12] sm:$0xff]
        %v1136 = vld [vmem:[%s12 + $0x8] sm:$0xff]
        %v1137 = vld [vmem:[%s12 + $0x10] sm:$0xff]
        %v1138 = vld [vmem:[%s12 + $0x18] sm:$0xff]
        %v1139 = vld [vmem:[%s14] sm:$0x1]
        %v1141 = vlaneseq
        %v1142 = vshrl.u32 %v1141, 7
        %v1143 = vsub.s32 0, %v1142
        %v1144 = vrot.slane %v1139, %v1143
        %v1147 = vsel %vm565, %v1051, 0
        %1149 = vmatprep.subr.mxu0 0.0
        %1150 = vmatpush1.msra.mxu0 %v1135
        %1151 = vmatprep.subr.mxu0 0.0
        %1152 = vmatpush1.msra.mxu0 %v1136
        %1153 = vmatprep.subr.mxu0 0.0
        %1154 = vmatpush1.msra.mxu0 %v1137
        %1155 = vmatprep.subr.mxu0 0.0
        %1156 = vmatpush1.msra.mxu0 %v1138
        %1157 = vmatprep.subr.mxu0 0.0
        %1158 = vmatpush1.msra.mxu0 0.0
        %1159 = vmatprep.subr.mxu0 0.0
        %1160 = vmatpush1.msra.mxu0 0.0
        %1161 = vmatprep.subr.mxu0 0.0
        %1162 = vmatpush1.msra.mxu0 0.0
        %1163 = vmatprep.subr.mxu0 0.0
        %1164 = vmatpush1.msra.mxu0 0.0
        %1165 = vmatprep.subr.mxu0 0.0
        %1166 = vmatpush1.msra.mxu0 0.0
        %1167 = vmatprep.subr.mxu0 0.0
        %1168 = vmatpush1.msra.mxu0 0.0
        %1169 = vmatprep.subr.mxu0 0.0
        %1170 = vmatpush1.msra.mxu0 0.0
        %1171 = vmatprep.subr.mxu0 0.0
        %1172 = vmatpush1.msra.mxu0 0.0
        %1173 = vmatprep.subr.mxu0 0.0
        %1174 = vmatpush1.msra.mxu0 0.0
        %1175 = vmatprep.subr.mxu0 0.0
        %1176 = vmatpush1.msra.mxu0 0.0
        %1177 = vmatprep.subr.mxu0 0.0
        %1178 = vmatpush1.msra.mxu0 0.0
        %1179 = vmatprep.subr.mxu0 0.0
        %1180 = vmatpush1.msra.mxu0 0.0
        %1181 = vmatprep.subr.mxu0 0.0
        %1182 = vmatpush1.msra.mxu0 0.0
        %1183 = vmatprep.subr.mxu0 0.0
        %1184 = vmatpush1.msra.mxu0 0.0
        %1185 = vmatprep.subr.mxu0 0.0
        %1186 = vmatpush1.msra.mxu0 0.0
        %1187 = vmatprep.subr.mxu0 0.0
        %1188 = vmatpush1.msra.mxu0 0.0
        %1189 = vmatprep.subr.mxu0 0.0
        %1190 = vmatpush1.msra.mxu0 0.0
        %1191 = vmatprep.subr.mxu0 0.0
        %1192 = vmatpush1.msra.mxu0 0.0
        %1193 = vmatprep.subr.mxu0 0.0
        %1194 = vmatpush1.msra.mxu0 0.0
        %1195 = vmatprep.subr.mxu0 0.0
        %1196 = vmatpush1.msra.mxu0 0.0
        %1197 = vmatprep.subr.mxu0 0.0
        %1198 = vmatpush1.msra.mxu0 0.0
        %1199 = vmatprep.subr.mxu0 0.0
        %1200 = vmatpush1.msra.mxu0 0.0
        %1201 = vmatprep.subr.mxu0 0.0
        %1202 = vmatpush1.msra.mxu0 0.0
        %1203 = vmatprep.subr.mxu0 0.0
        %1204 = vmatpush1.msra.mxu0 0.0
        %1205 = vmatprep.subr.mxu0 0.0
        %1206 = vmatpush1.msra.mxu0 0.0
        %1207 = vmatprep.subr.mxu0 0.0
        %1208 = vmatpush1.msra.mxu0 0.0
        %1209 = vmatprep.subr.mxu0 0.0
        %1210 = vmatpush1.msra.mxu0 0.0
        %1211 = vmatprep.subr.mxu0 0.0
        %1212 = vmatpush1.msra.mxu0 0.0
        %1213 = vmatprep.mubr.f32.mxu0 0.0
        %1214 = vmatmul.mubr.f32.gmra.mrb[0].mxu0 %v1147
        %v1215 = vpop.f32.mrb[0].mxu0
        %v1216 = vadd.f32 %v1144, %v1215
        %v1217 = vpop.f32.mrb[0].mxu0
        %1218 = vdwg.mxu0
        %v1219 = vadd.f32 %v1132, %v1216
        %v1220 = vxor.u32 %v1219, 2147483648
        %v1221 = vmul.f32 %v1220, 1.442695
        %v1222 = vpow.pop %v1221
        %v1223 = vadd.f32 %v1222, 1.0
        %v1224 = vrcp.pop %v1223
        %v1225 = vmul.f32 1.0, %v1224
        %1227 = vrot.lane.b32.xlu0 %v1216, 64
        %v1228 = vpop.permute.xlu0 %1227
        %v1230 = vmul.f32 %v1225, %v1228
        %1232 = vrot.lane.b32.xlu0 %v1230, 64
        %v1233 = vpop.permute.xlu0 %1232
        %v1235 = vadd.f32 %v1132, %v1233
        %v1236 = vtanh.pop %v1235
        %v1237 = vsub.f32 1.0, %v1225
        %1239 = vrot.lane.b32.xlu0 %v1236, 96
        %v1240 = vpop.permute.xlu0 %1239
        %v1242 = vmul.f32 %v1237, %v1240
        %1243 = vrot.lane.b32.xlu0 %v1051, 32
        %v1244 = vpop.permute.xlu0 %1243
        %v1246 = vmul.f32 %v1225, %v1244
        %v1247 = vadd.f32 %v1242, %v1246
        %1249 = vrot.lane.b32.xlu0 %v1247, 96
        %v1250 = vpop.permute.xlu0 %1249
        %1252 = vst.msk [vmem:[%s639] sm:$0xff] %vm565, %v1250
        %1253 = vst.msk [vmem:[%s531] sm:$0xff] %vm565, %v1250
        %s1254 = sand.u32 %s361, 1
        %s1255 = scalar_lea.sflag [#allocation3], %s1254
        %s1256 = sand.u32 %s361, 1
        %s1257 = smul.addr %s1256, 8
        %s1258 = scalar_lea.vmem [#allocation2], %s1257
        // Predicated region
        $region85: #{tpu_custom_call.1} parent=79 // pred_check
          %p1259 = pneg %p371
        $region86: #{tpu_custom_call.1} parent=79 // pred_check_branch
          %1261 = sbr.rel (%p1259) target = $region88
        $region87: #{tpu_custom_call.1} parent=79 // pred_region
          %s1263 = ssub.s32 128, 128
          %1264 = vsyncadd %s1255, %s1263
          %s1265 = smul.addr %s33, 128
          %s1266 = scalar_lea.hbm %s15, %s1265
          %s1268 = sshll.u32 %s1258, 4
          %s1269 = int_to_ptr.vmem [resolvable:$true] %s1268
          %1271 = dma.vmem_to_hbm [thread:$0]  %s1269, 128, %s1266, %s1255
        $region88: #{tpu_custom_call.1} parent=79 // pred_fallthru
          _
        // Predicated region
        $region89: #{tpu_custom_call.1} parent=79 // pred_check
          %p1272 = pneg %p392
        $region90: #{tpu_custom_call.1} parent=79 // pred_check_branch
          %1274 = sbr.rel (%p1272) target = $region92
        $region91: #{tpu_custom_call.1} parent=79 // pred_region
          %s1276 = ssub.s32 256, 256
          %1277 = vsyncadd [#allocation5], %s1276
          %s1278 = sshll.u32 [#allocation4], 4
          %s1279 = int_to_ptr.vmem [resolvable:$true] %s1278
          %1284 = dma.vmem_to_hbm [thread:$0]  %s1279, 256, %s16, [#allocation5], 128, 128, 8
        $region92: #{tpu_custom_call.1} parent=79 // pred_fallthru
          _
        // Predicated region
        $region93: #{tpu_custom_call.1} parent=79 // pred_check
          %p1285 = pneg %p413
        $region94: #{tpu_custom_call.1} parent=79 // pred_check_branch
          %1287 = sbr.rel (%p1285) target = $region96
        $region95: #{tpu_custom_call.1} parent=79 // pred_region
          %s1289 = ssub.s32 128, 128
          %1290 = vsyncadd [#allocation5], %s1289
          %s1292 = sshll.u32 [#allocation6], 4
          %s1293 = int_to_ptr.vmem [resolvable:$true] %s1292
          %1295 = dma.vmem_to_hbm [thread:$0]  %s1293, 128, %s17, [#allocation5]
        $region96: #{tpu_custom_call.1} parent=79 // pred_fallthru
          _
        // Predicated region
        $region97: #{tpu_custom_call.1} parent=79 // pred_check
          %p1296 = pneg %p392
        $region98: #{tpu_custom_call.1} parent=79 // pred_check_branch
          %1298 = sbr.rel (%p1296) target = $region100
        $region99: #{tpu_custom_call.1} parent=79 // pred_region
          %1299 = dma.done [#allocation5], 256
        $region100: #{tpu_custom_call.1} parent=79 // pred_fallthru
          _
        // Predicated region
        $region101: #{tpu_custom_call.1} parent=79 // pred_check
          %p1300 = pneg %p413
        $region102: #{tpu_custom_call.1} parent=79 // pred_check_branch
          %1302 = sbr.rel (%p1300) target = $region104
        $region103: #{tpu_custom_call.1} parent=79 // pred_region
          %1303 = dma.done [#allocation5], 128
        $region104: #{tpu_custom_call.1} parent=79 // pred_fallthru
          _
      $region80: #{tpu_custom_call.1} parent=5 // pred_fallthru
        _
      %p1304 = scmp.le.s32.totalorder 2, %s28
      // Predicated region
      $region105: #{tpu_custom_call.1} parent=5 // pred_check
        %p1305 = pneg %p1304
      $region106: #{tpu_custom_call.1} parent=5 // pred_check_branch
        %1307 = sbr.rel (%p1305) target = $region108
      $region107: #{tpu_custom_call.1} parent=5 // pred_region
        %s1308 = ssub.s32 %s28, 2
        // Predicated region
        $region109: #{tpu_custom_call.1} parent=107 // pred_check
          %p1309 = pneg %p377
        $region110: #{tpu_custom_call.1} parent=107 // pred_check_branch
          %1311 = sbr.rel (%p1309) target = $region112
        $region111: #{tpu_custom_call.1} parent=107 // pred_region
          %s1312 = sand.u32 %s362, 1
          %s1313 = scalar_lea.sflag [#allocation3], %s1312
          %s1314 = sand.u32 %s362, 1
          %s1315 = smul.addr %s1314, 8
          %s1316 = scalar_lea.vmem [#allocation2], %s1315
          %1317 = dma.done %s1313, 128
        $region112: #{tpu_custom_call.1} parent=107 // pred_fallthru
          _
      $region108: #{tpu_custom_call.1} parent=5 // pred_fallthru
        _
    $region6: #{tpu_custom_call.1} parent=1 // loop_footer
      %s32 = sadd.s32 1, %s28
    $region7: #{tpu_custom_call.1} parent=1 // loop_footer_branch
      %27 = sbr.rel target = $region3
    $region8: #{tpu_custom_call.1} parent=1 // loop_exit
      _
    %1318 = vsyncpa [#allocation3], 1
    %s1319 = scalar_lea.sflag [#allocation3], 1
    %1320 = vsyncpa %s1319, 1
    %1321 = vsyncpa [#allocation5], 1

</llo_original>
